<compile_context>
chip_gen: v7x
topology: tpu7x:2x2x1
jax: 0.10.0
libtpu: 0.0.40
codegen_flags: <defaults>
</compile_context>

<pallas_src>
import functools

import jax
import jax.numpy as jnp
from jax.experimental import pallas as pl
from jax.experimental.pallas import tpu as pltpu


def _layer_norm(x, w, b, eps=1e-5):
    # x: (M, D) f32, w/b: (1, D) f32
    mu = jnp.mean(x, axis=-1, keepdims=True)
    var = jnp.mean((x - mu) ** 2, axis=-1, keepdims=True)
    return (x - mu) * jax.lax.rsqrt(var + eps) * w + b


def _gelu_erf(x):
    return 0.5 * x * (1.0 + jax.lax.erf(x * jnp.float32(0.7071067811865476)))


# ---------------------------------------------------------------------------
# Stage 1: pre-LN + fused QKV projection (row-tiled over N*L tokens).
# ---------------------------------------------------------------------------
def _ln_qkv_kernel(x_ref, lnw_ref, lnb_ref, wqkv_ref, bqkv_ref, qkv_ref):
    h = _layer_norm(x_ref[...], lnw_ref[...], lnb_ref[...])        # f32
    qkv = jnp.dot(h.astype(wqkv_ref.dtype), wqkv_ref[...],
                  preferred_element_type=jnp.float32) + bqkv_ref[...]
    qkv_ref[...] = qkv.astype(qkv_ref.dtype)


# ---------------------------------------------------------------------------
# Stage 2: attention, one grid step per (batch, head).  The head axis is the
# innermost reduction axis for the head-averaged attention-weight output.
# ---------------------------------------------------------------------------
def _attention_kernel(q_ref, k_ref, v_ref, ctx_ref, attn_ref, attn_acc):
    h = pl.program_id(1)
    n_heads = pl.num_programs(1)

    @pl.when(h == 0)
    def _init():
        attn_acc[...] = jnp.zeros_like(attn_acc)

    q = q_ref[...]                               # (L, hd) bf16 (scale folded)
    k = k_ref[...]
    v = v_ref[...]
    s = jnp.einsum("qd,kd->qk", q, k,
                   preferred_element_type=jnp.float32)             # (L, L) f32
    m = jnp.max(s, axis=-1, keepdims=True)
    p = jnp.exp(s - m)
    inv = pl.reciprocal(jnp.sum(p, axis=-1, keepdims=True), approx=True)
    p = p * inv                                                    # softmax
    attn_acc[...] += p
    ctx = jnp.dot(p.astype(v.dtype), v, preferred_element_type=jnp.float32)
    ctx_ref[...] = ctx.astype(ctx_ref.dtype)

    @pl.when(h == n_heads - 1)
    def _finish():
        attn_ref[...] = attn_acc[...] * (1.0 / n_heads)


# ---------------------------------------------------------------------------
# Stage 3: output projection + residual + pre-LN FFN, with an F-reduction
# grid axis (innermost, "arbitrary") and a VMEM f32 accumulator.
# ---------------------------------------------------------------------------
def _outproj_ffn_kernel(x_ref, ctx_ref, wo_ref, bo_ref, ln2w_ref, ln2b_ref,
                        w1_ref, b1_ref, w2_ref, b2_ref, out_ref,
                        xnew_s, h2_s, acc_s):
    f = pl.program_id(1)

    @pl.when(f == 0)
    def _init():
        attn_out = jnp.dot(ctx_ref[...], wo_ref[...],
                           preferred_element_type=jnp.float32) + bo_ref[...]
        x_new = x_ref[...] + attn_out                        # residual #1
        xnew_s[...] = x_new
        h2_s[...] = _layer_norm(x_new, ln2w_ref[...],
                                ln2b_ref[...]).astype(h2_s.dtype)
        acc_s[...] = jnp.zeros_like(acc_s)

    f1 = jnp.dot(h2_s[...], w1_ref[...],
                 preferred_element_type=jnp.float32) + b1_ref[...]
    g = _gelu_erf(f1)
    acc_s[...] += jnp.dot(g.astype(w2_ref.dtype), w2_ref[...],
                          preferred_element_type=jnp.float32)

    @pl.when(f == pl.num_programs(1) - 1)
    def _finish():
        out_ref[...] = xnew_s[...] + acc_s[...] + b2_ref[...]   # residual #2


# ---------------------------------------------------------------------------
# Tiling / VMEM helpers.
# ---------------------------------------------------------------------------
def _pick_row_tile(total, cap=256):
    best = None
    for t in range(min(total, cap), 0, -1):
        if total % t == 0:
            if t % 8 == 0:
                return t
            if best is None:
                best = t
    return best or total


def _pick_f_tile(total, cap=512):
    for t in range(min(total, cap), 0, -1):
        if total % t == 0 and t % 128 == 0:
            return t
    return total


def _nbytes(shape, dtype):
    n = 1
    for s in shape:
        n *= int(s)
    return n * jnp.dtype(dtype).itemsize


def _vmem_limit(block_bytes):
    # double-buffered blocks + headroom, clamped to [16 MiB, 64 MiB]
    limit = int(2.5 * sum(block_bytes)) + (4 << 20)
    return max(16 << 20, min(limit, 64 << 20))


# ---------------------------------------------------------------------------
# Wrapper.
# ---------------------------------------------------------------------------
def transformer_layer(x_lnd, params, *, num_heads,
                      compute_dtype=jnp.bfloat16):
    """x_lnd: (L, N, D) float32. Returns (out (L, N, D) f32, attn (N, L, L) f32)."""
    L, N, D = x_lnd.shape
    F = params["w1"].shape[1]
    H = num_heads
    hd = D // H
    assert hd * H == D
    R = N * L
    f32 = jnp.float32
    scaling = jnp.float32(hd) ** -0.5

    x_rows = jnp.transpose(x_lnd, (1, 0, 2)).reshape(R, D).astype(f32)

    # weight-side preprocessing: fold q scaling, fuse QKV, cast to bf16
    wqkv = jnp.concatenate(
        [params["wq"] * scaling, params["wk"], params["wv"]], axis=1
    ).astype(compute_dtype)                                  # (D, 3D)
    bqkv = jnp.concatenate(
        [params["bq"] * scaling, params["bk"], params["bv"]], axis=1
    ).astype(f32)                                            # (1, 3D)
    wo = params["wo"].astype(compute_dtype)
    w1 = params["w1"].astype(compute_dtype)
    w2 = params["w2"].astype(compute_dtype)

    TM = _pick_row_tile(R)
    TF = _pick_f_tile(F)
    n_row = R // TM
    n_f = F // TF

    # -------------------------- stage 1: LN1 + QKV -------------------------
    blocks1 = [((TM, D), f32), ((1, D), f32), ((1, D), f32),
               ((D, 3 * D), compute_dtype), ((1, 3 * D), f32),
               ((TM, 3 * D), compute_dtype)]
    qkv = pl.pallas_call(
        _ln_qkv_kernel,
        out_shape=jax.ShapeDtypeStruct((R, 3 * D), compute_dtype),
        grid=(n_row,),
        in_specs=[
            pl.BlockSpec((TM, D), lambda i: (i, 0)),
            pl.BlockSpec((1, D), lambda i: (0, 0)),
            pl.BlockSpec((1, D), lambda i: (0, 0)),
            pl.BlockSpec((D, 3 * D), lambda i: (0, 0)),
            pl.BlockSpec((1, 3 * D), lambda i: (0, 0)),
        ],
        out_specs=pl.BlockSpec((TM, 3 * D), lambda i: (i, 0)),
        compiler_params=pltpu.CompilerParams(
            dimension_semantics=("parallel",),
            vmem_limit_bytes=_vmem_limit([_nbytes(s, d) for s, d in blocks1])),
    )(x_rows, params["ln1_w"], params["ln1_b"], wqkv, bqkv)

    # head split in the wrapper (layout plumbing stays in XLA)
    q = qkv[:, 0 * D:1 * D].reshape(N, L, H, hd).transpose(0, 2, 1, 3)
    k = qkv[:, 1 * D:2 * D].reshape(N, L, H, hd).transpose(0, 2, 1, 3)
    v = qkv[:, 2 * D:3 * D].reshape(N, L, H, hd).transpose(0, 2, 1, 3)

    # --------------------------- stage 2: attention ------------------------
    blocks2 = ([((L, hd), compute_dtype)] * 4          # q, k, v, ctx blocks
               + [((L, L), f32), ((L, L), f32)])       # attn out + scratch
    qkv_spec = pl.BlockSpec((None, None, L, hd), lambda n, h: (n, h, 0, 0))
    ctx, attn = pl.pallas_call(
        _attention_kernel,
        out_shape=(jax.ShapeDtypeStruct((N, H, L, hd), compute_dtype),
                   jax.ShapeDtypeStruct((N, L, L), f32)),
        grid=(N, H),
        in_specs=[qkv_spec, qkv_spec, qkv_spec],
        out_specs=(pl.BlockSpec((None, None, L, hd), lambda n, h: (n, h, 0, 0)),
                   pl.BlockSpec((None, L, L), lambda n, h: (n, 0, 0))),
        scratch_shapes=[pltpu.VMEM((L, L), f32)],
        compiler_params=pltpu.CompilerParams(
            dimension_semantics=("parallel", "arbitrary"),
            vmem_limit_bytes=_vmem_limit([_nbytes(s, d) for s, d in blocks2])),
    )(q, k, v)

    ctx_rows = ctx.transpose(0, 2, 1, 3).reshape(R, D)

    # --------------- stage 3: out-proj + residual + FFN --------------------
    blocks3 = [((TM, D), f32), ((TM, D), compute_dtype),
               ((D, D), compute_dtype), ((1, D), f32),
               ((1, D), f32), ((1, D), f32),
               ((D, TF), compute_dtype), ((1, TF), f32),
               ((TF, D), compute_dtype), ((1, D), f32),
               ((TM, D), f32),
               ((TM, D), f32), ((TM, D), compute_dtype), ((TM, D), f32)]
    out_rows = pl.pallas_call(
        _outproj_ffn_kernel,
        out_shape=jax.ShapeDtypeStruct((R, D), f32),
        grid=(n_row, n_f),
        in_specs=[
            pl.BlockSpec((TM, D), lambda i, f: (i, 0)),   # x rows (residual)
            pl.BlockSpec((TM, D), lambda i, f: (i, 0)),   # ctx rows
            pl.BlockSpec((D, D), lambda i, f: (0, 0)),    # Wo
            pl.BlockSpec((1, D), lambda i, f: (0, 0)),    # bo
            pl.BlockSpec((1, D), lambda i, f: (0, 0)),    # ln2 w
            pl.BlockSpec((1, D), lambda i, f: (0, 0)),    # ln2 b
            pl.BlockSpec((D, TF), lambda i, f: (0, f)),   # W1 tile
            pl.BlockSpec((1, TF), lambda i, f: (0, f)),   # b1 tile
            pl.BlockSpec((TF, D), lambda i, f: (f, 0)),   # W2 tile
            pl.BlockSpec((1, D), lambda i, f: (0, 0)),    # b2
        ],
        out_specs=pl.BlockSpec((TM, D), lambda i, f: (i, 0)),
        scratch_shapes=[
            pltpu.VMEM((TM, D), f32),            # x + attn_out (residual)
            pltpu.VMEM((TM, D), compute_dtype),  # LN2 output (matmul operand)
            pltpu.VMEM((TM, D), f32),            # FFN accumulator
        ],
        compiler_params=pltpu.CompilerParams(
            dimension_semantics=("parallel", "arbitrary"),
            vmem_limit_bytes=_vmem_limit([_nbytes(s, d) for s, d in blocks3])),
    )(x_rows, ctx_rows, wo, params["bo"], params["ln2_w"], params["ln2_b"],
      w1, params["b1"], w2, params["b2"])

    out = out_rows.reshape(N, L, D).transpose(1, 0, 2)      # (L, N, D)
    return out, attn


# ---------------------------------------------------------------------------
# Pure-JAX reference mirroring the PyTorch forward (f32 everywhere).
# ---------------------------------------------------------------------------
def reference_transformer_layer(x_lnd, params, num_heads):
    L, N, D = x_lnd.shape
    hd = D // num_heads
    scaling = hd ** -0.5
    x = jnp.transpose(x_lnd, (1, 0, 2))              # (N, L, D)

    def ln(v, w, b):
        mu = jnp.mean(v, -1, keepdims=True)
        var = jnp.mean((v - mu) ** 2, -1, keepdims=True)
        return (v - mu) / jnp.sqrt(var + 1e-5) * w + b

    residual = x
    h = ln(x, params["ln1_w"], params["ln1_b"])
    q = (h @ params["wq"] + params["bq"]) * scaling
    k = h @ params["wk"] + params["bk"]
    v = h @ params["wv"] + params["bv"]
    q = q.reshape(N, L, num_heads, hd).transpose(0, 2, 1, 3)
    k = k.reshape(N, L, num_heads, hd).transpose(0, 2, 1, 3)
    v = v.reshape(N, L, num_heads, hd).transpose(0, 2, 1, 3)
    scores = jnp.einsum("nhld,nhmd->nhlm", q, k)
    p = jax.nn.softmax(scores, axis=-1)
    attn = jnp.mean(p, axis=1)                       # (N, L, L)
    ctx = jnp.einsum("nhlm,nhmd->nhld", p, v).transpose(0, 2, 1, 3).reshape(N, L, D)
    x = residual + (ctx @ params["wo"] + params["bo"])

    residual = x
    h2 = ln(x, params["ln2_w"], params["ln2_b"])
    f1 = h2 @ params["w1"] + params["b1"]
    g = 0.5 * f1 * (1.0 + jax.lax.erf(f1 / jnp.sqrt(2.0)))
    x = residual + (g @ params["w2"] + params["b2"])
    return jnp.transpose(x, (1, 0, 2)), attn


def init_params(key, dim, ffn_dim):
    ks = jax.random.split(key, 12)
    s = 0.02
    return {
        "ln1_w": jnp.ones((1, dim), jnp.float32),
        "ln1_b": jnp.zeros((1, dim), jnp.float32),
        "wq": s * jax.random.normal(ks[0], (dim, dim), jnp.float32),
        "bq": s * jax.random.normal(ks[1], (1, dim), jnp.float32),
        "wk": s * jax.random.normal(ks[2], (dim, dim), jnp.float32),
        "bk": s * jax.random.normal(ks[3], (1, dim), jnp.float32),
        "wv": s * jax.random.normal(ks[4], (dim, dim), jnp.float32),
        "bv": s * jax.random.normal(ks[5], (1, dim), jnp.float32),
        "wo": s * jax.random.normal(ks[6], (dim, dim), jnp.float32),
        "bo": s * jax.random.normal(ks[7], (1, dim), jnp.float32),
        "ln2_w": jnp.ones((1, dim), jnp.float32),
        "ln2_b": jnp.zeros((1, dim), jnp.float32),
        "w1": s * jax.random.normal(ks[8], (dim, ffn_dim), jnp.float32),
        "b1": s * jax.random.normal(ks[9], (1, ffn_dim), jnp.float32),
        "w2": s * jax.random.normal(ks[10], (ffn_dim, dim), jnp.float32),
        "b2": s * jax.random.normal(ks[11], (1, dim), jnp.float32),
    }


if __name__ == "__main__":
    L, N, D, H = 8, 2, 32, 4          # seq len, batch, dim, heads
    F = 4 * D                          # ffn_dim
    key = jax.random.PRNGKey(0)
    k_x, k_p = jax.random.split(key)
    x = jax.random.normal(k_x, (L, N, D), jnp.float32)
    params = init_params(k_p, D, F)

    fn = jax.jit(functools.partial(transformer_layer, num_heads=H))
    out, attn = fn(x, params)
    out = jax.block_until_ready(out)
    attn = jax.block_until_ready(attn)

    ref_out, ref_attn = reference_transformer_layer(x, params, H)
    assert out.shape == (L, N, D) and attn.shape == (N, L, L)
    # bf16 matmul operands + approx reciprocal -> slightly looser tolerance
    assert jnp.allclose(out, ref_out, rtol=2e-2, atol=2e-2)
    assert jnp.allclose(attn, ref_attn, rtol=2e-2, atol=2e-2)

    print("KERNEL_OK")
</pallas_src>

<mosaic_0001>
module attributes {stable_mosaic.version = 11 : i64} {
  func.func @_ln_qkv_kernel(%arg0: i32, %arg1: memref<16x32xf32, #tpu.memory_space<vmem>>, %arg2: memref<1x32xf32, #tpu.memory_space<vmem>>, %arg3: memref<1x32xf32, #tpu.memory_space<vmem>>, %arg4: memref<32x96xbf16, #tpu.memory_space<vmem>>, %arg5: memref<1x96xf32, #tpu.memory_space<vmem>>, %arg6: memref<16x96xbf16, #tpu.memory_space<vmem>>) attributes {dimension_semantics = [#tpu.dimension_semantics<parallel>], iteration_bounds = array<i64: 1>, scalar_prefetch = 0 : i64, scratch_operands = 0 : i64, tpu.core_type = #tpu.core_type<tc>, window_params = [{transform_indices = @transform_0, window_bounds = array<i64: 16, 32>}, {pipeline_mode = #tpu.pipeline_mode<synchronous>, transform_indices = @transform_1, window_bounds = array<i64: 1, 32>}, {pipeline_mode = #tpu.pipeline_mode<synchronous>, transform_indices = @transform_2, window_bounds = array<i64: 1, 32>}, {pipeline_mode = #tpu.pipeline_mode<synchronous>, transform_indices = @transform_3, window_bounds = array<i64: 32, 96>}, {pipeline_mode = #tpu.pipeline_mode<synchronous>, transform_indices = @transform_4, window_bounds = array<i64: 1, 96>}, {transform_indices = @transform_5, window_bounds = array<i64: 16, 96>}]} {
    %c0 = arith.constant 0 : index
    %c0_0 = arith.constant 0 : index
    %0 = vector.load %arg1[%c0, %c0_0] : memref<16x32xf32, #tpu.memory_space<vmem>>, vector<16x32xf32>
    %c0_1 = arith.constant 0 : index
    %c0_2 = arith.constant 0 : index
    %1 = vector.load %arg2[%c0_1, %c0_2] : memref<1x32xf32, #tpu.memory_space<vmem>>, vector<1x32xf32>
    %c0_3 = arith.constant 0 : index
    %c0_4 = arith.constant 0 : index
    %2 = vector.load %arg3[%c0_3, %c0_4] : memref<1x32xf32, #tpu.memory_space<vmem>>, vector<1x32xf32>
    %cst = arith.constant dense<0.000000e+00> : vector<16xf32>
    %3 = vector.multi_reduction <add>, %0, %cst [1] : vector<16x32xf32> to vector<16xf32>
    %4 = vector.shape_cast %3 : vector<16xf32> to vector<16x1xf32>
    %cst_5 = arith.constant 3.200000e+01 : f32
    %5 = vector.broadcast %cst_5 : f32 to vector<16x1xf32>
    %6 = arith.divf %4, %5 : vector<16x1xf32>
    %7 = vector.broadcast %6 : vector<16x1xf32> to vector<16x32xf32>
    %8 = arith.subf %0, %7 : vector<16x32xf32>
    %9 = arith.mulf %8, %8 : vector<16x32xf32>
    %cst_6 = arith.constant dense<0.000000e+00> : vector<16xf32>
    %10 = vector.multi_reduction <add>, %9, %cst_6 [1] : vector<16x32xf32> to vector<16xf32>
    %11 = vector.shape_cast %10 : vector<16xf32> to vector<16x1xf32>
    %cst_7 = arith.constant 3.200000e+01 : f32
    %12 = vector.broadcast %cst_7 : f32 to vector<16x1xf32>
    %13 = arith.divf %11, %12 : vector<16x1xf32>
    %14 = vector.broadcast %6 : vector<16x1xf32> to vector<16x32xf32>
    %15 = arith.subf %0, %14 : vector<16x32xf32>
    %cst_8 = arith.constant 9.99999974E-6 : f32
    %16 = vector.broadcast %cst_8 : f32 to vector<16x1xf32>
    %17 = arith.addf %13, %16 : vector<16x1xf32>
    %18 = math.rsqrt %17 : vector<16x1xf32>
    %19 = vector.broadcast %18 : vector<16x1xf32> to vector<16x32xf32>
    %20 = arith.mulf %15, %19 : vector<16x32xf32>
    %21 = vector.broadcast %1 : vector<1x32xf32> to vector<16x32xf32>
    %22 = arith.mulf %20, %21 : vector<16x32xf32>
    %23 = vector.broadcast %2 : vector<1x32xf32> to vector<16x32xf32>
    %24 = arith.addf %22, %23 : vector<16x32xf32>
    %25 = arith.truncf %24 : vector<16x32xf32> to vector<16x32xbf16>
    %c0_9 = arith.constant 0 : index
    %c0_10 = arith.constant 0 : index
    %26 = vector.load %arg4[%c0_9, %c0_10] : memref<32x96xbf16, #tpu.memory_space<vmem>>, vector<32x96xbf16>
    %cst_11 = arith.constant dense<0.000000e+00> : vector<16x96xf32>
    %27 = tpu.matmul %25, %26, %cst_11 {dimension_numbers = #tpu.dot_dimension_numbers<[1], [0], [0], [1], [0, 0, 1, 1], [], []>} : vector<16x32xbf16>, vector<32x96xbf16>, vector<16x96xf32> -> vector<16x96xf32>
    %c0_12 = arith.constant 0 : index
    %c0_13 = arith.constant 0 : index
    %28 = vector.load %arg5[%c0_12, %c0_13] : memref<1x96xf32, #tpu.memory_space<vmem>>, vector<1x96xf32>
    %29 = vector.broadcast %28 : vector<1x96xf32> to vector<16x96xf32>
    %30 = arith.addf %27, %29 : vector<16x96xf32>
    %31 = arith.truncf %30 : vector<16x96xf32> to vector<16x96xbf16>
    %c0_14 = arith.constant 0 : index
    %c0_15 = arith.constant 0 : index
    %32 = vector.load %arg6[%c0_14, %c0_15] : memref<16x96xbf16, #tpu.memory_space<vmem>>, vector<16x96xbf16>
    tpu.vector_store %arg6[%c0_14, %c0_15], %31 {strides = array<i32>} : memref<16x96xbf16, #tpu.memory_space<vmem>>, vector<16x96xbf16>,
    return
  }
  func.func @transform_0(%arg0: i32) -> (i32, i32) {
    %c0_i32 = arith.constant 0 : i32
    %c0_i32_0 = arith.constant 0 : i32
    return %arg0, %c0_i32 : i32, i32
  }
  func.func @transform_1(%arg0: i32) -> (i32, i32) {
    %c0_i32 = arith.constant 0 : i32
    %c0_i32_0 = arith.constant 0 : i32
    %c0_i32_1 = arith.constant 0 : i32
    return %c0_i32, %c0_i32_0 : i32, i32
  }
  func.func @transform_2(%arg0: i32) -> (i32, i32) {
    %c0_i32 = arith.constant 0 : i32
    %c0_i32_0 = arith.constant 0 : i32
    %c0_i32_1 = arith.constant 0 : i32
    return %c0_i32, %c0_i32_0 : i32, i32
  }
  func.func @transform_3(%arg0: i32) -> (i32, i32) {
    %c0_i32 = arith.constant 0 : i32
    %c0_i32_0 = arith.constant 0 : i32
    %c0_i32_1 = arith.constant 0 : i32
    return %c0_i32, %c0_i32_0 : i32, i32
  }
  func.func @transform_4(%arg0: i32) -> (i32, i32) {
    %c0_i32 = arith.constant 0 : i32
    %c0_i32_0 = arith.constant 0 : i32
    %c0_i32_1 = arith.constant 0 : i32
    return %c0_i32, %c0_i32_0 : i32, i32
  }
  func.func @transform_5(%arg0: i32) -> (i32, i32) {
    %c0_i32 = arith.constant 0 : i32
    %c0_i32_0 = arith.constant 0 : i32
    return %arg0, %c0_i32 : i32, i32
  }
}

module attributes {stable_mosaic.version = 11 : i64} {
  func.func @_attention_kernel(%arg0: i32, %arg1: i32, %arg2: memref<1x1x8x8xbf16, #tpu.memory_space<vmem>>, %arg3: memref<1x1x8x8xbf16, #tpu.memory_space<vmem>>, %arg4: memref<1x1x8x8xbf16, #tpu.memory_space<vmem>>, %arg5: memref<1x1x8x8xbf16, #tpu.memory_space<vmem>>, %arg6: memref<1x8x8xf32, #tpu.memory_space<vmem>>, %arg7: memref<8x8xf32, #tpu.memory_space<vmem>>) attributes {dimension_semantics = [#tpu.dimension_semantics<parallel>, #tpu.dimension_semantics<arbitrary>], iteration_bounds = array<i64: 2, 4>, scalar_prefetch = 0 : i64, scratch_operands = 1 : i64, tpu.core_type = #tpu.core_type<tc>, window_params = [{transform_indices = @transform_0, window_bounds = array<i64: 1, 1, 8, 8>}, {transform_indices = @transform_1, window_bounds = array<i64: 1, 1, 8, 8>}, {transform_indices = @transform_2, window_bounds = array<i64: 1, 1, 8, 8>}, {transform_indices = @transform_3, window_bounds = array<i64: 1, 1, 8, 8>}, {transform_indices = @transform_4, window_bounds = array<i64: 1, 8, 8>}]} {
    %c0_i32 = arith.constant 0 : i32
    %0 = arith.cmpi eq, %arg1, %c0_i32 : i32
    %1 = arith.extui %0 : i1 to i32
    %c0_i32_0 = arith.constant 0 : i32
    %2 = arith.cmpi ne, %1, %c0_i32_0 : i32
    scf.if %2 {
      %cst_24 = arith.constant 0.000000e+00 : f32
      %32 = vector.broadcast %cst_24 : f32 to vector<8x8xf32>
      %c0_25 = arith.constant 0 : index
      %c0_26 = arith.constant 0 : index
      %33 = vector.load %arg7[%c0_25, %c0_26] : memref<8x8xf32, #tpu.memory_space<vmem>>, vector<8x8xf32>
      tpu.vector_store %arg7[%c0_25, %c0_26], %32 {strides = array<i32>} : memref<8x8xf32, #tpu.memory_space<vmem>>, vector<8x8xf32>,
    } else {
    }
    %c0 = arith.constant 0 : index
    %c0_1 = arith.constant 0 : index
    %c0_2 = arith.constant 0 : index
    %c0_3 = arith.constant 0 : index
    %3 = vector.load %arg2[%c0, %c0_1, %c0_2, %c0_3] : memref<1x1x8x8xbf16, #tpu.memory_space<vmem>>, vector<1x1x8x8xbf16>
    %4 = vector.shape_cast %3 : vector<1x1x8x8xbf16> to vector<8x8xbf16>
    %c0_4 = arith.constant 0 : index
    %c0_5 = arith.constant 0 : index
    %c0_6 = arith.constant 0 : index
    %c0_7 = arith.constant 0 : index
    %5 = vector.load %arg3[%c0_4, %c0_5, %c0_6, %c0_7] : memref<1x1x8x8xbf16, #tpu.memory_space<vmem>>, vector<1x1x8x8xbf16>
    %6 = vector.shape_cast %5 : vector<1x1x8x8xbf16> to vector<8x8xbf16>
    %c0_8 = arith.constant 0 : index
    %c0_9 = arith.constant 0 : index
    %c0_10 = arith.constant 0 : index
    %c0_11 = arith.constant 0 : index
    %7 = vector.load %arg4[%c0_8, %c0_9, %c0_10, %c0_11] : memref<1x1x8x8xbf16, #tpu.memory_space<vmem>>, vector<1x1x8x8xbf16>
    %8 = vector.shape_cast %7 : vector<1x1x8x8xbf16> to vector<8x8xbf16>
    "tpu.trace_start"() <{level = 10 : i32, message = "qd,kd->qk"}> : () -> ()
    %cst = arith.constant dense<0.000000e+00> : vector<8x8xf32>
    %9 = tpu.matmul %4, %6, %cst {dimension_numbers = #tpu.dot_dimension_numbers<[1], [1], [0], [0], [0, 0, 1, 0], [], []>} : vector<8x8xbf16>, vector<8x8xbf16>, vector<8x8xf32> -> vector<8x8xf32>
    "tpu.trace_stop"() : () -> ()
    %cst_12 = arith.constant dense<0xFF800000> : vector<8xf32>
    %10 = vector.multi_reduction <maximumf>, %9, %cst_12 [1] : vector<8x8xf32> to vector<8xf32>
    %11 = vector.shape_cast %10 : vector<8xf32> to vector<8x1xf32>
    %12 = vector.broadcast %11 : vector<8x1xf32> to vector<8x8xf32>
    %13 = arith.subf %9, %12 : vector<8x8xf32>
    %14 = math.exp %13 : vector<8x8xf32>
    %cst_13 = arith.constant dense<0.000000e+00> : vector<8xf32>
    %15 = vector.multi_reduction <add>, %14, %cst_13 [1] : vector<8x8xf32> to vector<8xf32>
    %16 = vector.shape_cast %15 : vector<8xf32> to vector<8x1xf32>
    %17 = tpu.reciprocal %16 {approx = true} : vector<8x1xf32> -> vector<8x1xf32>
    %18 = vector.broadcast %17 : vector<8x1xf32> to vector<8x8xf32>
    %19 = arith.mulf %14, %18 : vector<8x8xf32>
    %c0_14 = arith.constant 0 : index
    %c0_15 = arith.constant 0 : index
    %20 = vector.load %arg7[%c0_14, %c0_15] : memref<8x8xf32, #tpu.memory_space<vmem>>, vector<8x8xf32>
    %21 = arith.addf %20, %19 : vector<8x8xf32>
    %c0_16 = arith.constant 0 : index
    %c0_17 = arith.constant 0 : index
    %22 = vector.load %arg7[%c0_16, %c0_17] : memref<8x8xf32, #tpu.memory_space<vmem>>, vector<8x8xf32>
    tpu.vector_store %arg7[%c0_16, %c0_17], %21 {strides = array<i32>} : memref<8x8xf32, #tpu.memory_space<vmem>>, vector<8x8xf32>,
    %23 = arith.truncf %19 : vector<8x8xf32> to vector<8x8xbf16>
    %cst_18 = arith.constant dense<0.000000e+00> : vector<8x8xf32>
    %24 = tpu.matmul %23, %8, %cst_18 {dimension_numbers = #tpu.dot_dimension_numbers<[1], [0], [0], [1], [0, 0, 1, 1], [], []>} : vector<8x8xbf16>, vector<8x8xbf16>, vector<8x8xf32> -> vector<8x8xf32>
    %25 = arith.truncf %24 : vector<8x8xf32> to vector<8x8xbf16>
    %c0_19 = arith.constant 0 : index
    %c0_20 = arith.constant 0 : index
    %c0_21 = arith.constant 0 : index
    %c0_22 = arith.constant 0 : index
    %26 = vector.load %arg5[%c0_19, %c0_20, %c0_21, %c0_22] : memref<1x1x8x8xbf16, #tpu.memory_space<vmem>>, vector<1x1x8x8xbf16>
    %27 = vector.shape_cast %26 : vector<1x1x8x8xbf16> to vector<8x8xbf16>
    %28 = vector.shape_cast %25 : vector<8x8xbf16> to vector<1x1x8x8xbf16>
    tpu.vector_store %arg5[%c0_19, %c0_20, %c0_21, %c0_22], %28 {strides = array<i32>} : memref<1x1x8x8xbf16, #tpu.memory_space<vmem>>, vector<1x1x8x8xbf16>,
    %c3_i32 = arith.constant 3 : i32
    %29 = arith.cmpi eq, %arg1, %c3_i32 : i32
    %30 = arith.extui %29 : i1 to i32
    %c0_i32_23 = arith.constant 0 : i32
    %31 = arith.cmpi ne, %30, %c0_i32_23 : i32
    scf.if %31 {
      %c0_24 = arith.constant 0 : index
      %c0_25 = arith.constant 0 : index
      %32 = vector.load %arg7[%c0_24, %c0_25] : memref<8x8xf32, #tpu.memory_space<vmem>>, vector<8x8xf32>
      %cst_26 = arith.constant 2.500000e-01 : f32
      %33 = vector.broadcast %cst_26 : f32 to vector<8x8xf32>
      %34 = arith.mulf %32, %33 : vector<8x8xf32>
      %c0_27 = arith.constant 0 : index
      %c0_28 = arith.constant 0 : index
      %c0_29 = arith.constant 0 : index
      %35 = vector.load %arg6[%c0_27, %c0_28, %c0_29] : memref<1x8x8xf32, #tpu.memory_space<vmem>>, vector<1x8x8xf32>
      %36 = vector.shape_cast %35 : vector<1x8x8xf32> to vector<8x8xf32>
      %37 = vector.shape_cast %34 : vector<8x8xf32> to vector<1x8x8xf32>
      tpu.vector_store %arg6[%c0_27, %c0_28, %c0_29], %37 {strides = array<i32>} : memref<1x8x8xf32, #tpu.memory_space<vmem>>, vector<1x8x8xf32>,
    } else {
    }
    return
  }
  func.func @transform_0(%arg0: i32, %arg1: i32) -> (i32, i32, i32, i32) {
    %c0_i32 = arith.constant 0 : i32
    %c0_i32_0 = arith.constant 0 : i32
    %c0_i32_1 = arith.constant 0 : i32
    return %arg0, %arg1, %c0_i32, %c0_i32_0 : i32, i32, i32, i32
  }
  func.func @transform_1(%arg0: i32, %arg1: i32) -> (i32, i32, i32, i32) {
    %c0_i32 = arith.constant 0 : i32
    %c0_i32_0 = arith.constant 0 : i32
    %c0_i32_1 = arith.constant 0 : i32
    return %arg0, %arg1, %c0_i32, %c0_i32_0 : i32, i32, i32, i32
  }
  func.func @transform_2(%arg0: i32, %arg1: i32) -> (i32, i32, i32, i32) {
    %c0_i32 = arith.constant 0 : i32
    %c0_i32_0 = arith.constant 0 : i32
    %c0_i32_1 = arith.constant 0 : i32
    return %arg0, %arg1, %c0_i32, %c0_i32_0 : i32, i32, i32, i32
  }
  func.func @transform_3(%arg0: i32, %arg1: i32) -> (i32, i32, i32, i32) {
    %c0_i32 = arith.constant 0 : i32
    %c0_i32_0 = arith.constant 0 : i32
    %c0_i32_1 = arith.constant 0 : i32
    return %arg0, %arg1, %c0_i32, %c0_i32_0 : i32, i32, i32, i32
  }
  func.func @transform_4(%arg0: i32, %arg1: i32) -> (i32, i32, i32) {
    %c0_i32 = arith.constant 0 : i32
    %c0_i32_0 = arith.constant 0 : i32
    %c0_i32_1 = arith.constant 0 : i32
    return %arg0, %c0_i32, %c0_i32_0 : i32, i32, i32
  }
}

module attributes {stable_mosaic.version = 11 : i64} {
  func.func @_outproj_ffn_kernel(%arg0: i32, %arg1: i32, %arg2: memref<16x32xf32, #tpu.memory_space<vmem>>, %arg3: memref<16x32xbf16, #tpu.memory_space<vmem>>, %arg4: memref<32x32xbf16, #tpu.memory_space<vmem>>, %arg5: memref<1x32xf32, #tpu.memory_space<vmem>>, %arg6: memref<1x32xf32, #tpu.memory_space<vmem>>, %arg7: memref<1x32xf32, #tpu.memory_space<vmem>>, %arg8: memref<32x128xbf16, #tpu.memory_space<vmem>>, %arg9: memref<1x128xf32, #tpu.memory_space<vmem>>, %arg10: memref<128x32xbf16, #tpu.memory_space<vmem>>, %arg11: memref<1x32xf32, #tpu.memory_space<vmem>>, %arg12: memref<16x32xf32, #tpu.memory_space<vmem>>, %arg13: memref<16x32xf32, #tpu.memory_space<vmem>>, %arg14: memref<16x32xbf16, #tpu.memory_space<vmem>>, %arg15: memref<16x32xf32, #tpu.memory_space<vmem>>) attributes {dimension_semantics = [#tpu.dimension_semantics<parallel>, #tpu.dimension_semantics<arbitrary>], iteration_bounds = array<i64: 1, 1>, scalar_prefetch = 0 : i64, scratch_operands = 3 : i64, tpu.core_type = #tpu.core_type<tc>, window_params = [{transform_indices = @transform_0, window_bounds = array<i64: 16, 32>}, {transform_indices = @transform_1, window_bounds = array<i64: 16, 32>}, {pipeline_mode = #tpu.pipeline_mode<synchronous>, transform_indices = @transform_2, window_bounds = array<i64: 32, 32>}, {pipeline_mode = #tpu.pipeline_mode<synchronous>, transform_indices = @transform_3, window_bounds = array<i64: 1, 32>}, {pipeline_mode = #tpu.pipeline_mode<synchronous>, transform_indices = @transform_4, window_bounds = array<i64: 1, 32>}, {pipeline_mode = #tpu.pipeline_mode<synchronous>, transform_indices = @transform_5, window_bounds = array<i64: 1, 32>}, {transform_indices = @transform_6, window_bounds = array<i64: 32, 128>}, {transform_indices = @transform_7, window_bounds = array<i64: 1, 128>}, {transform_indices = @transform_8, window_bounds = array<i64: 128, 32>}, {pipeline_mode = #tpu.pipeline_mode<synchronous>, transform_indices = @transform_9, window_bounds = array<i64: 1, 32>}, {transform_indices = @transform_10, window_bounds = array<i64: 16, 32>}]} {
    %c0_i32 = arith.constant 0 : i32
    %0 = arith.cmpi eq, %arg1, %c0_i32 : i32
    %1 = arith.extui %0 : i1 to i32
    %c0_i32_0 = arith.constant 0 : i32
    %2 = arith.cmpi ne, %1, %c0_i32_0 : i32
    scf.if %2 {
      %c0_18 = arith.constant 0 : index
      %c0_19 = arith.constant 0 : index
      %26 = vector.load %arg3[%c0_18, %c0_19] : memref<16x32xbf16, #tpu.memory_space<vmem>>, vector<16x32xbf16>
      %c0_20 = arith.constant 0 : index
      %c0_21 = arith.constant 0 : index
      %27 = vector.load %arg4[%c0_20, %c0_21] : memref<32x32xbf16, #tpu.memory_space<vmem>>, vector<32x32xbf16>
      %cst_22 = arith.constant dense<0.000000e+00> : vector<16x32xf32>
      %28 = tpu.matmul %26, %27, %cst_22 {dimension_numbers = #tpu.dot_dimension_numbers<[1], [0], [0], [1], [0, 0, 1, 1], [], []>} : vector<16x32xbf16>, vector<32x32xbf16>, vector<16x32xf32> -> vector<16x32xf32>
      %c0_23 = arith.constant 0 : index
      %c0_24 = arith.constant 0 : index
      %29 = vector.load %arg5[%c0_23, %c0_24] : memref<1x32xf32, #tpu.memory_space<vmem>>, vector<1x32xf32>
      %30 = vector.broadcast %29 : vector<1x32xf32> to vector<16x32xf32>
      %31 = arith.addf %28, %30 : vector<16x32xf32>
      %c0_25 = arith.constant 0 : index
      %c0_26 = arith.constant 0 : index
      %32 = vector.load %arg2[%c0_25, %c0_26] : memref<16x32xf32, #tpu.memory_space<vmem>>, vector<16x32xf32>
      %33 = arith.addf %32, %31 : vector<16x32xf32>
      %c0_27 = arith.constant 0 : index
      %c0_28 = arith.constant 0 : index
      %34 = vector.load %arg13[%c0_27, %c0_28] : memref<16x32xf32, #tpu.memory_space<vmem>>, vector<16x32xf32>
      tpu.vector_store %arg13[%c0_27, %c0_28], %33 {strides = array<i32>} : memref<16x32xf32, #tpu.memory_space<vmem>>, vector<16x32xf32>,
      %c0_29 = arith.constant 0 : index
      %c0_30 = arith.constant 0 : index
      %35 = vector.load %arg6[%c0_29, %c0_30] : memref<1x32xf32, #tpu.memory_space<vmem>>, vector<1x32xf32>
      %c0_31 = arith.constant 0 : index
      %c0_32 = arith.constant 0 : index
      %36 = vector.load %arg7[%c0_31, %c0_32] : memref<1x32xf32, #tpu.memory_space<vmem>>, vector<1x32xf32>
      %cst_33 = arith.constant dense<0.000000e+00> : vector<16xf32>
      %37 = vector.multi_reduction <add>, %33, %cst_33 [1] : vector<16x32xf32> to vector<16xf32>
      %38 = vector.shape_cast %37 : vector<16xf32> to vector<16x1xf32>
      %cst_34 = arith.constant 3.200000e+01 : f32
      %39 = vector.broadcast %cst_34 : f32 to vector<16x1xf32>
      %40 = arith.divf %38, %39 : vector<16x1xf32>
      %41 = vector.broadcast %40 : vector<16x1xf32> to vector<16x32xf32>
      %42 = arith.subf %33, %41 : vector<16x32xf32>
      %43 = arith.mulf %42, %42 : vector<16x32xf32>
      %cst_35 = arith.constant dense<0.000000e+00> : vector<16xf32>
      %44 = vector.multi_reduction <add>, %43, %cst_35 [1] : vector<16x32xf32> to vector<16xf32>
      %45 = vector.shape_cast %44 : vector<16xf32> to vector<16x1xf32>
      %cst_36 = arith.constant 3.200000e+01 : f32
      %46 = vector.broadcast %cst_36 : f32 to vector<16x1xf32>
      %47 = arith.divf %45, %46 : vector<16x1xf32>
      %48 = vector.broadcast %40 : vector<16x1xf32> to vector<16x32xf32>
      %49 = arith.subf %33, %48 : vector<16x32xf32>
      %cst_37 = arith.constant 9.99999974E-6 : f32
      %50 = vector.broadcast %cst_37 : f32 to vector<16x1xf32>
      %51 = arith.addf %47, %50 : vector<16x1xf32>
      %52 = math.rsqrt %51 : vector<16x1xf32>
      %53 = vector.broadcast %52 : vector<16x1xf32> to vector<16x32xf32>
      %54 = arith.mulf %49, %53 : vector<16x32xf32>
      %55 = vector.broadcast %35 : vector<1x32xf32> to vector<16x32xf32>
      %56 = arith.mulf %54, %55 : vector<16x32xf32>
      %57 = vector.broadcast %36 : vector<1x32xf32> to vector<16x32xf32>
      %58 = arith.addf %56, %57 : vector<16x32xf32>
      %59 = arith.truncf %58 : vector<16x32xf32> to vector<16x32xbf16>
      %c0_38 = arith.constant 0 : index
      %c0_39 = arith.constant 0 : index
      %60 = vector.load %arg14[%c0_38, %c0_39] : memref<16x32xbf16, #tpu.memory_space<vmem>>, vector<16x32xbf16>
      tpu.vector_store %arg14[%c0_38, %c0_39], %59 {strides = array<i32>} : memref<16x32xbf16, #tpu.memory_space<vmem>>, vector<16x32xbf16>,
      %cst_40 = arith.constant 0.000000e+00 : f32
      %61 = vector.broadcast %cst_40 : f32 to vector<16x32xf32>
      %c0_41 = arith.constant 0 : index
      %c0_42 = arith.constant 0 : index
      %62 = vector.load %arg15[%c0_41, %c0_42] : memref<16x32xf32, #tpu.memory_space<vmem>>, vector<16x32xf32>
      tpu.vector_store %arg15[%c0_41, %c0_42], %61 {strides = array<i32>} : memref<16x32xf32, #tpu.memory_space<vmem>>, vector<16x32xf32>,
    } else {
    }
    %c0 = arith.constant 0 : index
    %c0_1 = arith.constant 0 : index
    %3 = vector.load %arg14[%c0, %c0_1] : memref<16x32xbf16, #tpu.memory_space<vmem>>, vector<16x32xbf16>
    %c0_2 = arith.constant 0 : index
    %c0_3 = arith.constant 0 : index
    %4 = vector.load %arg8[%c0_2, %c0_3] : memref<32x128xbf16, #tpu.memory_space<vmem>>, vector<32x128xbf16>
    %cst = arith.constant dense<0.000000e+00> : vector<16x128xf32>
    %5 = tpu.matmul %3, %4, %cst {dimension_numbers = #tpu.dot_dimension_numbers<[1], [0], [0], [1], [0, 0, 1, 1], [], []>} : vector<16x32xbf16>, vector<32x128xbf16>, vector<16x128xf32> -> vector<16x128xf32>
    %c0_4 = arith.constant 0 : index
    %c0_5 = arith.constant 0 : index
    %6 = vector.load %arg9[%c0_4, %c0_5] : memref<1x128xf32, #tpu.memory_space<vmem>>, vector<1x128xf32>
    %7 = vector.broadcast %6 : vector<1x128xf32> to vector<16x128xf32>
    %8 = arith.addf %5, %7 : vector<16x128xf32>
    %cst_6 = arith.constant 5.000000e-01 : f32
    %9 = vector.broadcast %cst_6 : f32 to vector<16x128xf32>
    %10 = arith.mulf %9, %8 : vector<16x128xf32>
    %cst_7 = arith.constant 0.707106769 : f32
    %11 = vector.broadcast %cst_7 : f32 to vector<16x128xf32>
    %12 = arith.mulf %8, %11 : vector<16x128xf32>
    %13 = math.erf %12 : vector<16x128xf32>
    %cst_8 = arith.constant 1.000000e+00 : f32
    %14 = vector.broadcast %cst_8 : f32 to vector<16x128xf32>
    %15 = arith.addf %14, %13 : vector<16x128xf32>
    %16 = arith.mulf %10, %15 : vector<16x128xf32>
    %c0_9 = arith.constant 0 : index
    %c0_10 = arith.constant 0 : index
    %17 = vector.load %arg15[%c0_9, %c0_10] : memref<16x32xf32, #tpu.memory_space<vmem>>, vector<16x32xf32>
    %18 = arith.truncf %16 : vector<16x128xf32> to vector<16x128xbf16>
    %c0_11 = arith.constant 0 : index
    %c0_12 = arith.constant 0 : index
    %19 = vector.load %arg10[%c0_11, %c0_12] : memref<128x32xbf16, #tpu.memory_space<vmem>>, vector<128x32xbf16>
    %cst_13 = arith.constant dense<0.000000e+00> : vector<16x32xf32>
    %20 = tpu.matmul %18, %19, %cst_13 {dimension_numbers = #tpu.dot_dimension_numbers<[1], [0], [0], [1], [0, 0, 1, 1], [], []>} : vector<16x128xbf16>, vector<128x32xbf16>, vector<16x32xf32> -> vector<16x32xf32>
    %21 = arith.addf %17, %20 : vector<16x32xf32>
    %c0_14 = arith.constant 0 : index
    %c0_15 = arith.constant 0 : index
    %22 = vector.load %arg15[%c0_14, %c0_15] : memref<16x32xf32, #tpu.memory_space<vmem>>, vector<16x32xf32>
    tpu.vector_store %arg15[%c0_14, %c0_15], %21 {strides = array<i32>} : memref<16x32xf32, #tpu.memory_space<vmem>>, vector<16x32xf32>,
    %c0_i32_16 = arith.constant 0 : i32
    %23 = arith.cmpi eq, %arg1, %c0_i32_16 : i32
    %24 = arith.extui %23 : i1 to i32
    %c0_i32_17 = arith.constant 0 : i32
    %25 = arith.cmpi ne, %24, %c0_i32_17 : i32
    scf.if %25 {
      %c0_18 = arith.constant 0 : index
      %c0_19 = arith.constant 0 : index
      %26 = vector.load %arg13[%c0_18, %c0_19] : memref<16x32xf32, #tpu.memory_space<vmem>>, vector<16x32xf32>
      %c0_20 = arith.constant 0 : index
      %c0_21 = arith.constant 0 : index
      %27 = vector.load %arg15[%c0_20, %c0_21] : memref<16x32xf32, #tpu.memory_space<vmem>>, vector<16x32xf32>
      %28 = arith.addf %26, %27 : vector<16x32xf32>
      %c0_22 = arith.constant 0 : index
      %c0_23 = arith.constant 0 : index
      %29 = vector.load %arg11[%c0_22, %c0_23] : memref<1x32xf32, #tpu.memory_space<vmem>>, vector<1x32xf32>
      %30 = vector.broadcast %29 : vector<1x32xf32> to vector<16x32xf32>
      %31 = arith.addf %28, %30 : vector<16x32xf32>
      %c0_24 = arith.constant 0 : index
      %c0_25 = arith.constant 0 : index
      %32 = vector.load %arg12[%c0_24, %c0_25] : memref<16x32xf32, #tpu.memory_space<vmem>>, vector<16x32xf32>
      tpu.vector_store %arg12[%c0_24, %c0_25], %31 {strides = array<i32>} : memref<16x32xf32, #tpu.memory_space<vmem>>, vector<16x32xf32>,
    } else {
    }
    return
  }
  func.func @transform_0(%arg0: i32, %arg1: i32) -> (i32, i32) {
    %c0_i32 = arith.constant 0 : i32
    %c0_i32_0 = arith.constant 0 : i32
    return %arg0, %c0_i32 : i32, i32
  }
  func.func @transform_1(%arg0: i32, %arg1: i32) -> (i32, i32) {
    %c0_i32 = arith.constant 0 : i32
    %c0_i32_0 = arith.constant 0 : i32
    return %arg0, %c0_i32 : i32, i32
  }
  func.func @transform_2(%arg0: i32, %arg1: i32) -> (i32, i32) {
    %c0_i32 = arith.constant 0 : i32
    %c0_i32_0 = arith.constant 0 : i32
    %c0_i32_1 = arith.constant 0 : i32
    return %c0_i32, %c0_i32_0 : i32, i32
  }
  func.func @transform_3(%arg0: i32, %arg1: i32) -> (i32, i32) {
    %c0_i32 = arith.constant 0 : i32
    %c0_i32_0 = arith.constant 0 : i32
    %c0_i32_1 = arith.constant 0 : i32
    return %c0_i32, %c0_i32_0 : i32, i32
  }
  func.func @transform_4(%arg0: i32, %arg1: i32) -> (i32, i32) {
    %c0_i32 = arith.constant 0 : i32
    %c0_i32_0 = arith.constant 0 : i32
    %c0_i32_1 = arith.constant 0 : i32
    return %c0_i32, %c0_i32_0 : i32, i32
  }
  func.func @transform_5(%arg0: i32, %arg1: i32) -> (i32, i32) {
    %c0_i32 = arith.constant 0 : i32
    %c0_i32_0 = arith.constant 0 : i32
    %c0_i32_1 = arith.constant 0 : i32
    return %c0_i32, %c0_i32_0 : i32, i32
  }
  func.func @transform_6(%arg0: i32, %arg1: i32) -> (i32, i32) {
    %c0_i32 = arith.constant 0 : i32
    %c0_i32_0 = arith.constant 0 : i32
    return %c0_i32, %arg1 : i32, i32
  }
  func.func @transform_7(%arg0: i32, %arg1: i32) -> (i32, i32) {
    %c0_i32 = arith.constant 0 : i32
    %c0_i32_0 = arith.constant 0 : i32
    return %c0_i32, %arg1 : i32, i32
  }
  func.func @transform_8(%arg0: i32, %arg1: i32) -> (i32, i32) {
    %c0_i32 = arith.constant 0 : i32
    %c0_i32_0 = arith.constant 0 : i32
    return %arg1, %c0_i32 : i32, i32
  }
  func.func @transform_9(%arg0: i32, %arg1: i32) -> (i32, i32) {
    %c0_i32 = arith.constant 0 : i32
    %c0_i32_0 = arith.constant 0 : i32
    %c0_i32_1 = arith.constant 0 : i32
    return %c0_i32, %c0_i32_0 : i32, i32
  }
  func.func @transform_10(%arg0: i32, %arg1: i32) -> (i32, i32) {
    %c0_i32 = arith.constant 0 : i32
    %c0_i32_0 = arith.constant 0 : i32
    return %arg0, %c0_i32 : i32, i32
  }
}

</mosaic_0001>

<llo_original>
// kernel: transformer_layer.4
$region0: #{transformer_layer.4}
  #allocation0 [shape = 'u32[]', space=smem, size = 0x4, offset = 0x4, fixed_abs, tag = 'smem constant byte address 0x4 - core index']
  #allocation1 [shape = 'u32[144,128]{1,0:T(1,128)}', space=vmem, size = 0x12000, scoped, tag = 'internal scratch']
  #allocation2 [shape = 'f32[8,8]{1,0:T(8,128)}', space=vmem, size = 0x1000, scoped, tag = 'scratch operand']
  %s0 = inlined_call_operand.vmem [shape: bf16[2,4,8,8], index: 0, kind: input, shape index: {}]
  %s1 = inlined_call_operand.vmem [shape: bf16[2,4,8,8], index: 1, kind: input, shape index: {}]
  %s2 = inlined_call_operand.vmem [shape: bf16[2,4,8,8], index: 2, kind: input, shape index: {}]
  %s3 = inlined_call_operand.vmem [shape: bf16[2,4,8,8], index: 3, kind: output, shape index: {0}]
  %s4 = inlined_call_operand.hbm [shape: f32[2,8,8], index: 4, kind: output, shape index: {1}]
  %5 = xla_tuple %s3, %s4
  %s6 = sld [smem:[#allocation0]]
  $region61: #{transformer_layer.4} parent=0
    _
  %s8 = ssub.s32 1, %s6
  %s9 = scalar_select 0, %s8, %s6
  $region1: #{transformer_layer.4} parent=0
    #allocation3 [shape = 'u8[8192]{0}', space=vmem, size = 0x2000, scoped, tag = 'output window, operand 1']
    #allocation4 [shape = 's32[2]{0}', space=sflag, size = 0x8, scoped, tag = 'scoped memory for transformer_layer.4']
    %10 = vsyncpa [#allocation4], 0
    %s11 = scalar_lea.sflag [#allocation4], 1
    %12 = vsyncpa %s11, 0
    loop: start=0, step=1, limit=10
    $region2: #{transformer_layer.4} parent=1 // loop_pre_header
      _
    $region3: #{transformer_layer.4} parent=1 // loop_header
      %s14 = sphi 0, %s18
      %p15 = scmp.ge.s32.totalorder %s14, 10
      %s21 = sphi 0, %s33
      %s22 = sphi 0, %s29
      %s23 = sphi 0, %s21
      %s24 = sphi 0, %s22
      %s25 = sphi 0, %s23
      %s26 = sphi 0, %s24
      %s38 = sphi 0, %s40
      %s41 = sphi 0, %s38
      %s42 = sphi 0, %s41
      %s58 = sphi 0, %s42
      %s66 = sphi 0, %s68
      %s69 = sphi 0, %s66
      %s70 = sphi 0, %s69
      %s86 = sphi 0, %s70
      %s94 = sphi 0, %s96
      %s97 = sphi 0, %s94
      %s98 = sphi 0, %s97
      %s114 = sphi 0, %s98
      %s122 = sphi 0, %s124
      %s125 = sphi 0, %s122
      %s126 = sphi 0, %s125
      %s142 = sphi 0, %s126
      %s148 = sphi 0, %s150
      %s151 = sphi 0, %s148
      %s152 = sphi 0, %s151
      %s168 = sphi 0, %s152
    $region4: #{transformer_layer.4} parent=1 // loop_header_branch
      %17 = sbr.rel (%p15) target = $region8
    $region5: #{transformer_layer.4} parent=1 // loop_body
      %s19 = ssub.s32 %s14, 1
      %s20 = ssub.s32 %s14, 2
      %s27 = sadd.s32 1, %s22
      %p28 = scmp.ge.s32.totalorder %s27, 4
      %s29 = scalar_select %p28, 0, %s27
      %s30 = sadd.s32 1, %s21
      %s31 = scalar_select %p28, %s30, %s21
      %p32 = scmp.ge.s32.totalorder %s31, 2
      %s33 = scalar_select %p32, 0, %s31
      %s34 = ssub.s32 %s21, %s33
      %s35 = ssub.s32 %s22, %s29
      %s36 = sor.u32 %s34, %s35
      %p37 = scmp.eq.s32.totalorder %s36, 0
      %s39 = sadd.s32 %s38, 1
      %s40 = scalar_select %p37, %s38, %s39
      %p43 = pneg %p37
      %p44 = scmp.eq.s32.totalorder %s14, 7
      %p45 = por %p43, %p44
      %p46 = scmp.ne.s32.totalorder %s38, %s41
      %p47 = scmp.eq.s32.totalorder %s14, 0
      %p48 = por %p46, %p47
      %p49 = scmp.ne.s32.totalorder %s38, %s41
      %p50 = scmp.eq.s32.totalorder %s19, 7
      %p51 = por %p49, %p50
      %p52 = scmp.ne.s32.totalorder %s41, %s42
      %p53 = scmp.eq.s32.totalorder %s19, 0
      %p54 = por %p52, %p53
      %p55 = scmp.ne.s32.totalorder %s41, %s42
      %p56 = scmp.eq.s32.totalorder %s20, 7
      %p57 = por %p55, %p56
      %p59 = scmp.ne.s32.totalorder %s42, %s58
      %p60 = scmp.eq.s32.totalorder %s20, 0
      %p61 = por %p59, %p60
      %s62 = ssub.s32 %s21, %s33
      %s63 = ssub.s32 %s22, %s29
      %s64 = sor.u32 %s62, %s63
      %p65 = scmp.eq.s32.totalorder %s64, 0
      %s67 = sadd.s32 %s66, 1
      %s68 = scalar_select %p65, %s66, %s67
      %p71 = pneg %p65
      %p72 = scmp.eq.s32.totalorder %s14, 7
      %p73 = por %p71, %p72
      %p74 = scmp.ne.s32.totalorder %s66, %s69
      %p75 = scmp.eq.s32.totalorder %s14, 0
      %p76 = por %p74, %p75
      %p77 = scmp.ne.s32.totalorder %s66, %s69
      %p78 = scmp.eq.s32.totalorder %s19, 7
      %p79 = por %p77, %p78
      %p80 = scmp.ne.s32.totalorder %s69, %s70
      %p81 = scmp.eq.s32.totalorder %s19, 0
      %p82 = por %p80, %p81
      %p83 = scmp.ne.s32.totalorder %s69, %s70
      %p84 = scmp.eq.s32.totalorder %s20, 7
      %p85 = por %p83, %p84
      %p87 = scmp.ne.s32.totalorder %s70, %s86
      %p88 = scmp.eq.s32.totalorder %s20, 0
      %p89 = por %p87, %p88
      %s90 = ssub.s32 %s21, %s33
      %s91 = ssub.s32 %s22, %s29
      %s92 = sor.u32 %s90, %s91
      %p93 = scmp.eq.s32.totalorder %s92, 0
      %s95 = sadd.s32 %s94, 1
      %s96 = scalar_select %p93, %s94, %s95
      %p99 = pneg %p93
      %p100 = scmp.eq.s32.totalorder %s14, 7
      %p101 = por %p99, %p100
      %p102 = scmp.ne.s32.totalorder %s94, %s97
      %p103 = scmp.eq.s32.totalorder %s14, 0
      %p104 = por %p102, %p103
      %p105 = scmp.ne.s32.totalorder %s94, %s97
      %p106 = scmp.eq.s32.totalorder %s19, 7
      %p107 = por %p105, %p106
      %p108 = scmp.ne.s32.totalorder %s97, %s98
      %p109 = scmp.eq.s32.totalorder %s19, 0
      %p110 = por %p108, %p109
      %p111 = scmp.ne.s32.totalorder %s97, %s98
      %p112 = scmp.eq.s32.totalorder %s20, 7
      %p113 = por %p111, %p112
      %p115 = scmp.ne.s32.totalorder %s98, %s114
      %p116 = scmp.eq.s32.totalorder %s20, 0
      %p117 = por %p115, %p116
      %s118 = ssub.s32 %s21, %s33
      %s119 = ssub.s32 %s22, %s29
      %s120 = sor.u32 %s118, %s119
      %p121 = scmp.eq.s32.totalorder %s120, 0
      %s123 = sadd.s32 %s122, 1
      %s124 = scalar_select %p121, %s122, %s123
      %p127 = pneg %p121
      %p128 = scmp.eq.s32.totalorder %s14, 7
      %p129 = por %p127, %p128
      %p130 = scmp.ne.s32.totalorder %s122, %s125
      %p131 = scmp.eq.s32.totalorder %s14, 0
      %p132 = por %p130, %p131
      %p133 = scmp.ne.s32.totalorder %s122, %s125
      %p134 = scmp.eq.s32.totalorder %s19, 7
      %p135 = por %p133, %p134
      %p136 = scmp.ne.s32.totalorder %s125, %s126
      %p137 = scmp.eq.s32.totalorder %s19, 0
      %p138 = por %p136, %p137
      %p139 = scmp.ne.s32.totalorder %s125, %s126
      %p140 = scmp.eq.s32.totalorder %s20, 7
      %p141 = por %p139, %p140
      %p143 = scmp.ne.s32.totalorder %s126, %s142
      %p144 = scmp.eq.s32.totalorder %s20, 0
      %p145 = por %p143, %p144
      %s146 = ssub.s32 %s21, %s33
      %p147 = scmp.eq.s32.totalorder %s146, 0
      %s149 = sadd.s32 %s148, 1
      %s150 = scalar_select %p147, %s148, %s149
      %p153 = pneg %p147
      %p154 = scmp.eq.s32.totalorder %s14, 7
      %p155 = por %p153, %p154
      %p156 = scmp.ne.s32.totalorder %s148, %s151
      %p157 = scmp.eq.s32.totalorder %s14, 0
      %p158 = por %p156, %p157
      %p159 = scmp.ne.s32.totalorder %s148, %s151
      %p160 = scmp.eq.s32.totalorder %s19, 7
      %p161 = por %p159, %p160
      %p162 = scmp.ne.s32.totalorder %s151, %s152
      %p163 = scmp.eq.s32.totalorder %s19, 0
      %p164 = por %p162, %p163
      %p165 = scmp.ne.s32.totalorder %s151, %s152
      %p166 = scmp.eq.s32.totalorder %s20, 7
      %p167 = por %p165, %p166
      %p169 = scmp.ne.s32.totalorder %s152, %s168
      %p170 = scmp.eq.s32.totalorder %s20, 0
      %p171 = por %p169, %p170
      %p172 = scmp.le.s32.totalorder 1, %s14
      %p173 = scmp.lt.s32.totalorder %s14, 9
      %p174 = pnand %p172, %p173
      %p175 = pneg %p174
      // Predicated region
      $region9: #{transformer_layer.4} parent=5 // pred_check
        _
      $region10: #{transformer_layer.4} parent=5 // pred_check_branch
        %177 = sbr.rel (%p174) target = $region12
      $region11: #{transformer_layer.4} parent=5 // pred_region
        %s178 = ssub.s32 %s14, 1
      $region12: #{transformer_layer.4} parent=5 // pred_fallthru
        _
      %p179 = scmp.lt.s32.totalorder %s14, 8
      // Predicated region
      $region13: #{transformer_layer.4} parent=5 // pred_check
        %p180 = pneg %p179
      $region14: #{transformer_layer.4} parent=5 // pred_check_branch
        %182 = sbr.rel (%p180) target = $region16
      $region15: #{transformer_layer.4} parent=5 // pred_region
        // Predicated region
        $region17: #{transformer_layer.4} parent=15 // pred_check
          %p183 = pneg %p48
        $region18: #{transformer_layer.4} parent=15 // pred_check_branch
          %185 = sbr.rel (%p183) target = $region20
        $region19: #{transformer_layer.4} parent=15 // pred_region
          %p186 = scmp.lt.s32.totalorder %s21, 1
          %s187 = scalar_select %p186, %s21, 1
          %p188 = scmp.lt.s32.totalorder %s22, 3
          %s189 = scalar_select %p188, %s22, 3
          %s190 = smul.addr %s187, 4
          %s191 = sadd.s32 %s189, %s190
          %s192 = smul.addr %s191, 4
          %s193 = scalar_lea.vmem %s0, %s192
        $region20: #{transformer_layer.4} parent=15 // pred_fallthru
          _
        // Predicated region
        $region21: #{transformer_layer.4} parent=15 // pred_check
          %p194 = pneg %p76
        $region22: #{transformer_layer.4} parent=15 // pred_check_branch
          %196 = sbr.rel (%p194) target = $region24
        $region23: #{transformer_layer.4} parent=15 // pred_region
          %p197 = scmp.lt.s32.totalorder %s21, 1
          %s198 = scalar_select %p197, %s21, 1
          %p199 = scmp.lt.s32.totalorder %s22, 3
          %s200 = scalar_select %p199, %s22, 3
          %s201 = smul.addr %s198, 4
          %s202 = sadd.s32 %s200, %s201
          %s203 = smul.addr %s202, 4
          %s204 = scalar_lea.vmem %s1, %s203
        $region24: #{transformer_layer.4} parent=15 // pred_fallthru
          _
        // Predicated region
        $region25: #{transformer_layer.4} parent=15 // pred_check
          %p205 = pneg %p104
        $region26: #{transformer_layer.4} parent=15 // pred_check_branch
          %207 = sbr.rel (%p205) target = $region28
        $region27: #{transformer_layer.4} parent=15 // pred_region
          %p208 = scmp.lt.s32.totalorder %s21, 1
          %s209 = scalar_select %p208, %s21, 1
          %p210 = scmp.lt.s32.totalorder %s22, 3
          %s211 = scalar_select %p210, %s22, 3
          %s212 = smul.addr %s209, 4
          %s213 = sadd.s32 %s211, %s212
          %s214 = smul.addr %s213, 4
          %s215 = scalar_lea.vmem %s2, %s214
        $region28: #{transformer_layer.4} parent=15 // pred_fallthru
          _
      $region16: #{transformer_layer.4} parent=5 // pred_fallthru
        _
      %p216 = scmp.le.s32.totalorder 1, %s14
      %p217 = scmp.lt.s32.totalorder %s14, 9
      %p218 = pnand %p216, %p217
      %p219 = pneg %p218
      // Predicated region
      $region29: #{transformer_layer.4} parent=5 // pred_check
        _
      $region30: #{transformer_layer.4} parent=5 // pred_check_branch
        %221 = sbr.rel (%p218) target = $region32
      $region31: #{transformer_layer.4} parent=5 // pred_region
        %s222 = ssub.s32 %s14, 1
        %p223 = scmp.lt.s32.totalorder %s23, 1
        %s224 = scalar_select %p223, %s23, 1
        %p225 = scmp.lt.s32.totalorder %s24, 3
        %s226 = scalar_select %p225, %s24, 3
        %s227 = smul.addr %s224, 4
        %s228 = sadd.s32 %s226, %s227
        %s229 = smul.addr %s228, 4
        %s230 = scalar_lea.vmem %s0, %s229
        %p231 = pneg %p54
        %p232 = pneg %p51
        %p233 = scmp.lt.s32.totalorder %s23, 1
        %s234 = scalar_select %p233, %s23, 1
        %p235 = scmp.lt.s32.totalorder %s24, 3
        %s236 = scalar_select %p235, %s24, 3
        %s237 = smul.addr %s234, 4
        %s238 = sadd.s32 %s236, %s237
        %s239 = smul.addr %s238, 4
        %s240 = scalar_lea.vmem %s1, %s239
        %p241 = pneg %p82
        %p242 = pneg %p79
        %p243 = scmp.lt.s32.totalorder %s23, 1
        %s244 = scalar_select %p243, %s23, 1
        %p245 = scmp.lt.s32.totalorder %s24, 3
        %s246 = scalar_select %p245, %s24, 3
        %s247 = smul.addr %s244, 4
        %s248 = sadd.s32 %s246, %s247
        %s249 = smul.addr %s248, 4
        %s250 = scalar_lea.vmem %s2, %s249
        %p251 = pneg %p110
        %p252 = pneg %p107
        %p253 = pneg %p138
        %p254 = pneg %p135
        %p255 = scmp.lt.s32.totalorder %s23, 1
        %s256 = scalar_select %p255, %s23, 1
        %p257 = scmp.lt.s32.totalorder %s24, 3
        %s258 = scalar_select %p257, %s24, 3
        %s259 = smul.addr %s256, 4
        %s260 = sadd.s32 %s258, %s259
        %s261 = smul.addr %s260, 4
        %s262 = scalar_lea.vmem %s3, %s261
        %p263 = pneg %p164
        %p264 = pneg %p161
        %s265 = sand.u32 %s151, 1
        %s266 = scalar_lea.sflag [#allocation4], %s265
        %s267 = sand.u32 %s151, 1
        %s268 = smul.addr %s267, 8
        %s269 = scalar_lea.vmem [#allocation3], %s268
        %p270 = scmp.lt.s32.totalorder %s23, 1
        %s271 = scalar_select %p270, %s23, 1
        %p272 = scmp.lt.s32.totalorder %s24, 3
        %s273 = scalar_select %p272, %s24, 3
        %s274 = smul.addr %s271, 4
        %s275 = sadd.s32 %s273, %s274
        %s276 = smul.addr %s275, 4
        %s277 = scalar_lea.vmem %s0, %s276
        %p278 = scmp.lt.s32.totalorder %s23, 1
        %s279 = scalar_select %p278, %s23, 1
        %p280 = scmp.lt.s32.totalorder %s24, 3
        %s281 = scalar_select %p280, %s24, 3
        %s282 = smul.addr %s279, 4
        %s283 = sadd.s32 %s281, %s282
        %s284 = smul.addr %s283, 4
        %s285 = scalar_lea.vmem %s1, %s284
        %p286 = scmp.lt.s32.totalorder %s23, 1
        %s287 = scalar_select %p286, %s23, 1
        %p288 = scmp.lt.s32.totalorder %s24, 3
        %s289 = scalar_select %p288, %s24, 3
        %s290 = smul.addr %s287, 4
        %s291 = sadd.s32 %s289, %s290
        %s292 = smul.addr %s291, 4
        %s293 = scalar_lea.vmem %s2, %s292
        %p294 = scmp.lt.s32.totalorder %s23, 1
        %s295 = scalar_select %p294, %s23, 1
        %p296 = scmp.lt.s32.totalorder %s24, 3
        %s297 = scalar_select %p296, %s24, 3
        %s298 = smul.addr %s295, 4
        %s299 = sadd.s32 %s297, %s298
        %s300 = smul.addr %s299, 4
        %s301 = scalar_lea.vmem %s3, %s300
        %p303 = scmp.eq.s32.totalorder %s24, 0
        // Predicated region
        $region33: #{transformer_layer.4} parent=31 // pred_check
          %p304 = pneg %p303
        $region34: #{transformer_layer.4} parent=31 // pred_check_branch
          %306 = sbr.rel (%p304) target = $region36
        $region35: #{transformer_layer.4} parent=31 // pred_region
          %vm307 = vcmask 64512
          %308 = vst.msk [vmem:[#allocation2] sm:$0xff] %vm307, 0.0
        $region36: #{transformer_layer.4} parent=31 // pred_fallthru
          _
        %v309 = vld [vmem:[%s277] sm:$0xf]
        %v310 = vld [vmem:[%s285] sm:$0xf]
        %v311 = vld [vmem:[%s293] sm:$0xf]
        %vm312 = vcmask 64512
        %v314 = vsel %vm312, %v309, 0
        %v317 = vsel %vm312, %v310, 0
        %319 = vmatprep.subr.bf16.mxu0 0
        %320 = vmatpush1.bf16.xpose.msra.mxu0 %v317
        %321 = vmatprep.subr.bf16.mxu0 0
        %322 = vmatpush1.bf16.xpose.msra.mxu0 0
        %323 = vmatprep.subr.bf16.mxu0 0
        %324 = vmatpush1.bf16.xpose.msra.mxu0 0
        %325 = vmatprep.subr.bf16.mxu0 0
        %326 = vmatpush1.bf16.xpose.msra.mxu0 0
        %327 = vmatprep.subr.bf16.mxu0 0
        %328 = vmatpush1.bf16.xpose.msra.mxu0 0
        %329 = vmatprep.subr.bf16.mxu0 0
        %330 = vmatpush1.bf16.xpose.msra.mxu0 0
        %331 = vmatprep.subr.bf16.mxu0 0
        %332 = vmatpush1.bf16.xpose.msra.mxu0 0
        %333 = vmatprep.subr.bf16.mxu0 0
        %334 = vmatpush1.bf16.xpose.msra.mxu0 0
        %335 = vmatprep.subr.bf16.mxu0 0
        %336 = vmatpush1.bf16.xpose.msra.mxu0 0
        %337 = vmatprep.subr.bf16.mxu0 0
        %338 = vmatpush1.bf16.xpose.msra.mxu0 0
        %339 = vmatprep.subr.bf16.mxu0 0
        %340 = vmatpush1.bf16.xpose.msra.mxu0 0
        %341 = vmatprep.subr.bf16.mxu0 0
        %342 = vmatpush1.bf16.xpose.msra.mxu0 0
        %343 = vmatprep.subr.bf16.mxu0 0
        %344 = vmatpush1.bf16.xpose.msra.mxu0 0
        %345 = vmatprep.subr.bf16.mxu0 0
        %346 = vmatpush1.bf16.xpose.msra.mxu0 0
        %347 = vmatprep.subr.bf16.mxu0 0
        %348 = vmatpush1.bf16.xpose.msra.mxu0 0
        %349 = vmatprep.subr.bf16.mxu0 0
        %350 = vmatpush1.bf16.xpose.msra.mxu0 0
        %351 = vmatprep.mubr.bf16.mxu0 0
        %352 = vmatmul.mubr.bf16.gmra.mrb[0].mxu0 %v314
        %v353 = vpop.f32.mrb[0].mxu0
        %v354 = vadd.f32 0.0, %v353
        %v355 = vpop.f32.mrb[0].mxu0
        %v356 = vpop.f32.mrb[0].mxu0
        %v357 = vpop.f32.mrb[0].mxu0
        %358 = vdwg.mxu0
        %v359 = vsel %vm312, %v354, -inf
        %360 = vmax.xlane.f32.xlu0 %v359
        %v361 = vpop.xlane.xlu0 %360
        %v362 = vsub.f32 %v354, %v361
        %v363 = vmul.f32 %v362, 1.442695
        %v364 = vpow.pop %v363
        %v365 = vsel %vm312, %v364, 0.0
        %366 = vadd.xlane.f32.xlu0 %v365
        %v367 = vpop.xlane.xlu0 %366
        %v368 = vrcp.pop %v367
        %v369 = vmul.f32 %v364, %v368
        %v370 = vld [vmem:[#allocation2] sm:$0xff]
        %v371 = vadd.f32 %v370, %v369
        %372 = vst.msk [vmem:[#allocation2] sm:$0xff] %vm312, %v371
        %v373 = vpack.c.bf16 %v369, %v369
        %v375 = vsel %vm312, %v373, 0
        %vm377 = vcmask 1043456
        %v379 = vsel %vm377, %v311, 0
        %381 = vmatprep.subr.bf16.mxu0 0
        %382 = vmatpush1.bf16.msra.mxu0 %v379
        %383 = vmatprep.subr.bf16.mxu0 0
        %384 = vmatpush1.bf16.msra.mxu0 0
        %385 = vmatprep.subr.bf16.mxu0 0
        %386 = vmatpush1.bf16.msra.mxu0 0
        %387 = vmatprep.subr.bf16.mxu0 0
        %388 = vmatpush1.bf16.msra.mxu0 0
        %389 = vmatprep.subr.bf16.mxu0 0
        %390 = vmatpush1.bf16.msra.mxu0 0
        %391 = vmatprep.subr.bf16.mxu0 0
        %392 = vmatpush1.bf16.msra.mxu0 0
        %393 = vmatprep.subr.bf16.mxu0 0
        %394 = vmatpush1.bf16.msra.mxu0 0
        %395 = vmatprep.subr.bf16.mxu0 0
        %396 = vmatpush1.bf16.msra.mxu0 0
        %397 = vmatprep.subr.bf16.mxu0 0
        %398 = vmatpush1.bf16.msra.mxu0 0
        %399 = vmatprep.subr.bf16.mxu0 0
        %400 = vmatpush1.bf16.msra.mxu0 0
        %401 = vmatprep.subr.bf16.mxu0 0
        %402 = vmatpush1.bf16.msra.mxu0 0
        %403 = vmatprep.subr.bf16.mxu0 0
        %404 = vmatpush1.bf16.msra.mxu0 0
        %405 = vmatprep.subr.bf16.mxu0 0
        %406 = vmatpush1.bf16.msra.mxu0 0
        %407 = vmatprep.subr.bf16.mxu0 0
        %408 = vmatpush1.bf16.msra.mxu0 0
        %409 = vmatprep.subr.bf16.mxu0 0
        %410 = vmatpush1.bf16.msra.mxu0 0
        %411 = vmatprep.subr.bf16.mxu0 0
        %412 = vmatpush1.bf16.msra.mxu0 0
        %413 = vmatprep.mubr.bf16.mxu0 0
        %414 = vmatmul.mubr.bf16.gmra.mrb[0].mxu0 %v375
        %v415 = vpop.f32.mrb[0].mxu0
        %v416 = vadd.f32 0.0, %v415
        %v417 = vpop.f32.mrb[0].mxu0
        %v418 = vpop.f32.mrb[0].mxu0
        %v419 = vpop.f32.mrb[0].mxu0
        %420 = vdwg.mxu0
        %v421 = vpack.c.bf16 %v416, %v416
        %vm422 = vcmask 60416
        %423 = vst.msk [vmem:[%s301] sm:$0xf] %vm422, %v421
        %p424 = scmp.eq.s32.totalorder %s24, 3
        // Predicated region
        $region37: #{transformer_layer.4} parent=31 // pred_check
          %p425 = pneg %p424
        $region38: #{transformer_layer.4} parent=31 // pred_check_branch
          %427 = sbr.rel (%p425) target = $region40
        $region39: #{transformer_layer.4} parent=31 // pred_region
          %v428 = vld [vmem:[#allocation2] sm:$0xff]
          %v429 = vmul.f32 %v428, 0.25
          %430 = vst.msk [vmem:[%s269] sm:$0xff] %vm312, %v429
        $region40: #{transformer_layer.4} parent=31 // pred_fallthru
          _
        %p431 = scmp.lt.s32.totalorder %s23, 1
        %s432 = scalar_select %p431, %s23, 1
        %p433 = scmp.lt.s32.totalorder %s24, 3
        %s434 = scalar_select %p433, %s24, 3
        %s435 = smul.addr %s432, 4
        %s436 = sadd.s32 %s434, %s435
        %s437 = smul.addr %s436, 4
        %s438 = scalar_lea.vmem %s3, %s437
        %s439 = sand.u32 %s151, 1
        %s440 = scalar_lea.sflag [#allocation4], %s439
        %s441 = sand.u32 %s151, 1
        %s442 = smul.addr %s441, 8
        %s443 = scalar_lea.vmem [#allocation3], %s442
        // Predicated region
        $region41: #{transformer_layer.4} parent=31 // pred_check
          %p444 = pneg %p135
        $region42: #{transformer_layer.4} parent=31 // pred_check_branch
          %446 = sbr.rel (%p444) target = $region44
        $region43: #{transformer_layer.4} parent=31 // pred_region
          _
        $region44: #{transformer_layer.4} parent=31 // pred_fallthru
          _
        // Predicated region
        $region45: #{transformer_layer.4} parent=31 // pred_check
          %p447 = pneg %p161
        $region46: #{transformer_layer.4} parent=31 // pred_check_branch
          %449 = sbr.rel (%p447) target = $region48
        $region47: #{transformer_layer.4} parent=31 // pred_region
          %s451 = ssub.s32 128, 128
          %452 = vsyncadd %s440, %s451
          %s453 = smul.addr %s23, 128
          %s454 = scalar_lea.hbm %s4, %s453
          %s456 = sshll.u32 %s443, 4
          %s457 = int_to_ptr.vmem [resolvable:$true] %s456
          %459 = dma.vmem_to_hbm [thread:$0]  %s457, 128, %s454, %s440
        $region48: #{transformer_layer.4} parent=31 // pred_fallthru
          _
      $region32: #{transformer_layer.4} parent=5 // pred_fallthru
        _
      %p460 = scmp.le.s32.totalorder 2, %s14
      // Predicated region
      $region49: #{transformer_layer.4} parent=5 // pred_check
        %p461 = pneg %p460
      $region50: #{transformer_layer.4} parent=5 // pred_check_branch
        %463 = sbr.rel (%p461) target = $region52
      $region51: #{transformer_layer.4} parent=5 // pred_region
        %s464 = ssub.s32 %s14, 2
        // Predicated region
        $region53: #{transformer_layer.4} parent=51 // pred_check
          %p465 = pneg %p141
        $region54: #{transformer_layer.4} parent=51 // pred_check_branch
          %467 = sbr.rel (%p465) target = $region56
        $region55: #{transformer_layer.4} parent=51 // pred_region
          %p468 = scmp.lt.s32.totalorder %s25, 1
          %s469 = scalar_select %p468, %s25, 1
          %p470 = scmp.lt.s32.totalorder %s26, 3
          %s471 = scalar_select %p470, %s26, 3
          %s472 = smul.addr %s469, 4
          %s473 = sadd.s32 %s471, %s472
          %s474 = smul.addr %s473, 4
          %s475 = scalar_lea.vmem %s3, %s474
        $region56: #{transformer_layer.4} parent=51 // pred_fallthru
          _
        // Predicated region
        $region57: #{transformer_layer.4} parent=51 // pred_check
          %p476 = pneg %p167
        $region58: #{transformer_layer.4} parent=51 // pred_check_branch
          %478 = sbr.rel (%p476) target = $region60
        $region59: #{transformer_layer.4} parent=51 // pred_region
          %s479 = sand.u32 %s152, 1
          %s480 = scalar_lea.sflag [#allocation4], %s479
          %s481 = sand.u32 %s152, 1
          %s482 = smul.addr %s481, 8
          %s483 = scalar_lea.vmem [#allocation3], %s482
          %484 = dma.done %s480, 128
        $region60: #{transformer_layer.4} parent=51 // pred_fallthru
          _
      $region52: #{transformer_layer.4} parent=5 // pred_fallthru
        _
    $region6: #{transformer_layer.4} parent=1 // loop_footer
      %s18 = sadd.s32 1, %s14
    $region7: #{transformer_layer.4} parent=1 // loop_footer_branch
      %13 = sbr.rel target = $region3
    $region8: #{transformer_layer.4} parent=1 // loop_exit
      _
    %485 = vsyncpa [#allocation4], 1
    %s486 = scalar_lea.sflag [#allocation4], 1
    %487 = vsyncpa %s486, 1

// kernel: transformer_layer.3
$region0: #{transformer_layer.3}
  #allocation0 [shape = 'u32[]', space=smem, size = 0x4, offset = 0x4, fixed_abs, tag = 'smem constant byte address 0x4 - core index']
  #allocation1 [shape = 'u32[144,128]{1,0:T(1,128)}', space=vmem, size = 0x12000, scoped, tag = 'internal scratch']
  %s0 = inlined_call_operand.vmem [shape: f32[16,32], index: 0, kind: input, shape index: {}]
  %s1 = inlined_call_operand.vmem [shape: f32[1,32], index: 1, kind: input, shape index: {}]
  %s2 = inlined_call_operand.vmem [shape: f32[1,32], index: 2, kind: input, shape index: {}]
  %s3 = inlined_call_operand.vmem [shape: bf16[32,96], index: 3, kind: input, shape index: {}]
  %s4 = inlined_call_operand.vmem [shape: f32[1,96], index: 4, kind: input, shape index: {}]
  %s5 = inlined_call_operand.vmem [shape: bf16[16,96], index: 5, kind: output, shape index: {}]
  %s6 = sld [smem:[#allocation0]]
  $region30: #{transformer_layer.3} parent=0
    _
  %s8 = ssub.s32 1, %s6
  %s9 = scalar_select 0, %s8, %s6
  // Predicated region
  $region2: #{transformer_layer.3} parent=0 // pred_check
    _
  $region3: #{transformer_layer.3} parent=0 // pred_check_branch
    %11 = sbr.rel (0) target = $region5
  $region4: #{transformer_layer.3} parent=0 // pred_region
    _
  $region5: #{transformer_layer.3} parent=0 // pred_fallthru
    _
  // Predicated region
  $region6: #{transformer_layer.3} parent=0 // pred_check
    _
  $region7: #{transformer_layer.3} parent=0 // pred_check_branch
    %13 = sbr.rel (0) target = $region9
  $region8: #{transformer_layer.3} parent=0 // pred_region
    _
  $region9: #{transformer_layer.3} parent=0 // pred_fallthru
    _
  // Predicated region
  $region10: #{transformer_layer.3} parent=0 // pred_check
    _
  $region11: #{transformer_layer.3} parent=0 // pred_check_branch
    %15 = sbr.rel (0) target = $region13
  $region12: #{transformer_layer.3} parent=0 // pred_region
    _
  $region13: #{transformer_layer.3} parent=0 // pred_fallthru
    _
  // Predicated region
  $region14: #{transformer_layer.3} parent=0 // pred_check
    _
  $region15: #{transformer_layer.3} parent=0 // pred_check_branch
    %17 = sbr.rel (0) target = $region17
  $region16: #{transformer_layer.3} parent=0 // pred_region
    _
  $region17: #{transformer_layer.3} parent=0 // pred_fallthru
    _
  // Predicated region
  $region18: #{transformer_layer.3} parent=0 // pred_check
    _
  $region19: #{transformer_layer.3} parent=0 // pred_check_branch
    %19 = sbr.rel (0) target = $region21
  $region20: #{transformer_layer.3} parent=0 // pred_region
    _
  $region21: #{transformer_layer.3} parent=0 // pred_fallthru
    _
  %v21 = vld [vmem:[%s0] sm:$0xff]
  %v22 = vld [vmem:[%s0 + $0x8] sm:$0xff]
  %v23 = vld [vmem:[%s1] sm:$0x1]
  %v24 = vld [vmem:[%s2] sm:$0x1]
  %vm25 = vcmask 261120
  %v26 = vsel %vm25, %v21, 0.0
  %27 = vadd.xlane.f32.xlu0 %v26
  %v28 = vpop.xlane.xlu0 %27
  %v29 = vsel %vm25, %v22, 0.0
  %30 = vadd.xlane.f32.xlu0 %v29
  %v31 = vpop.xlane.xlu0 %30
  %v32 = vrcp.pop 32.0
  %v33 = vmul.f32 %v28, %v32
  %v34 = vmul.f32 %v31, %v32
  %v35 = vsub.f32 %v21, %v33
  %v36 = vsub.f32 %v22, %v34
  %v37 = vmul.f32 %v35, %v35
  %v38 = vmul.f32 %v36, %v36
  %v39 = vsel %vm25, %v37, 0.0
  %40 = vadd.xlane.f32.xlu0 %v39
  %v41 = vpop.xlane.xlu0 %40
  %v42 = vsel %vm25, %v38, 0.0
  %43 = vadd.xlane.f32.xlu0 %v42
  %v44 = vpop.xlane.xlu0 %43
  %v45 = vmul.f32 %v41, %v32
  %v46 = vmul.f32 %v44, %v32
  %v47 = vadd.f32 %v45, 1e-05
  %v48 = vadd.f32 %v46, 1e-05
  %v49 = vrsqrt.pop %v47
  %v50 = vrsqrt.pop %v48
  %v51 = vmul.f32 %v35, %v49
  %v52 = vmul.f32 %v36, %v50
  %v54 = vlaneseq
  %v55 = vshrl.u32 %v54, 7
  %v56 = vsub.s32 0, %v55
  %v57 = vrot.slane %v23, %v56
  %v59 = vmul.f32 %v51, %v57
  %v60 = vmul.f32 %v52, %v57
  %v62 = vlaneseq
  %v63 = vshrl.u32 %v62, 7
  %v64 = vsub.s32 0, %v63
  %v65 = vrot.slane %v24, %v64
  %v67 = vadd.f32 %v59, %v65
  %v68 = vadd.f32 %v60, %v65
  %v69 = vpack.c.bf16 %v68, %v67
  %v70 = vld [vmem:[%s3] sm:$0xf]
  %v71 = vld [vmem:[%s3 + $0x4] sm:$0xf]
  %v72 = vld [vmem:[%s3 + $0x8] sm:$0xf]
  %v73 = vld [vmem:[%s3 + $0xc] sm:$0xf]
  %v74 = vld [vmem:[%s4] sm:$0x1]
  %v76 = vlaneseq
  %v77 = vshrl.u32 %v76, 7
  %v78 = vsub.s32 0, %v77
  %v79 = vrot.slane %v74, %v78
  %v85 = vunpack.c.l.b16 %v70
  %v86 = vunpack.c.l.b16 %v71
  %v87 = vunpack.c.l.b16 %v72
  %v88 = vunpack.c.l.b16 %v73
  %v89 = vpack.c.b16 %v86, %v85
  %v90 = vpack.c.b16 %v88, %v87
  %v94 = vsel %vm25, %v69, 0
  %96 = vmatprep.subr.bf16.mxu0 0
  %97 = vmatpush1.bf16.msra.mxu0 %v89
  %98 = vmatprep.subr.bf16.mxu0 0
  %99 = vmatpush1.bf16.msra.mxu0 %v90
  %100 = vmatprep.subr.bf16.mxu0 0
  %101 = vmatpush1.bf16.msra.mxu0 0
  %102 = vmatprep.subr.bf16.mxu0 0
  %103 = vmatpush1.bf16.msra.mxu0 0
  %104 = vmatprep.subr.bf16.mxu0 0
  %105 = vmatpush1.bf16.msra.mxu0 0
  %106 = vmatprep.subr.bf16.mxu0 0
  %107 = vmatpush1.bf16.msra.mxu0 0
  %108 = vmatprep.subr.bf16.mxu0 0
  %109 = vmatpush1.bf16.msra.mxu0 0
  %110 = vmatprep.subr.bf16.mxu0 0
  %111 = vmatpush1.bf16.msra.mxu0 0
  %112 = vmatprep.subr.bf16.mxu0 0
  %113 = vmatpush1.bf16.msra.mxu0 0
  %114 = vmatprep.subr.bf16.mxu0 0
  %115 = vmatpush1.bf16.msra.mxu0 0
  %116 = vmatprep.subr.bf16.mxu0 0
  %117 = vmatpush1.bf16.msra.mxu0 0
  %118 = vmatprep.subr.bf16.mxu0 0
  %119 = vmatpush1.bf16.msra.mxu0 0
  %120 = vmatprep.subr.bf16.mxu0 0
  %121 = vmatpush1.bf16.msra.mxu0 0
  %122 = vmatprep.subr.bf16.mxu0 0
  %123 = vmatpush1.bf16.msra.mxu0 0
  %124 = vmatprep.subr.bf16.mxu0 0
  %125 = vmatpush1.bf16.msra.mxu0 0
  %126 = vmatprep.subr.bf16.mxu0 0
  %127 = vmatpush1.bf16.msra.mxu0 0
  %128 = vmatprep.mubr.bf16.mxu0 0
  %129 = vmatmul.mubr.bf16.gmra.mrb[0].mxu0 %v94
  %v130 = vpop.f32.mrb[0].mxu0
  %v131 = vadd.f32 %v79, %v130
  %v132 = vpop.f32.mrb[0].mxu0
  %v133 = vpop.f32.mrb[0].mxu0
  %v134 = vadd.f32 %v79, %v133
  %v135 = vpop.f32.mrb[0].mxu0
  %136 = vdwg.mxu0
  %v137 = vpack.c.bf16 %v134, %v131
  %v139 = vunpack.c.l.b16 %v137
  %v140 = vunpack.c.h.b16 %v137
  %v141 = vpack.c.b16 %v139, %v139
  %v142 = vpack.c.b16 %v140, %v140
  %vm145 = vcmask 781312
  %146 = vst.msk [vmem:[%s5] sm:$0xf] %vm145, %v141
  %147 = vst.msk [vmem:[%s5 + $0x4] sm:$0xf] %vm145, %v142
  // Predicated region
  $region22: #{transformer_layer.3} parent=0 // pred_check
    _
  $region23: #{transformer_layer.3} parent=0 // pred_check_branch
    %149 = sbr.rel (0) target = $region25
  $region24: #{transformer_layer.3} parent=0 // pred_region
    _
  $region25: #{transformer_layer.3} parent=0 // pred_fallthru
    _
  // Predicated region
  $region26: #{transformer_layer.3} parent=0 // pred_check
    _
  $region27: #{transformer_layer.3} parent=0 // pred_check_branch
    %151 = sbr.rel (0) target = $region29
  $region28: #{transformer_layer.3} parent=0 // pred_region
    _
  $region29: #{transformer_layer.3} parent=0 // pred_fallthru
    _

// kernel: transformer_layer.5
$region0: #{transformer_layer.5}
  #allocation0 [shape = 'u32[]', space=smem, size = 0x4, offset = 0x4, fixed_abs, tag = 'smem constant byte address 0x4 - core index']
  #allocation1 [shape = 'u32[144,128]{1,0:T(1,128)}', space=vmem, size = 0x12000, scoped, tag = 'internal scratch']
  #allocation2 [shape = 'f32[16,32]{1,0:T(8,128)}', space=vmem, size = 0x2000, scoped, tag = 'scratch operand']
  #allocation3 [shape = 'bf16[16,32]{1,0:T(16,128)(2,1)}', space=vmem, size = 0x1000, scoped, tag = 'scratch operand']
  #allocation4 [shape = 'f32[16,32]{1,0:T(8,128)}', space=vmem, size = 0x2000, scoped, tag = 'scratch operand']
  %s0 = inlined_call_operand.vmem [shape: f32[16,32], index: 0, kind: input, shape index: {}]
  %s1 = inlined_call_operand.vmem [shape: bf16[16,32], index: 1, kind: input, shape index: {}]
  %s2 = inlined_call_operand.vmem [shape: bf16[32,32], index: 2, kind: input, shape index: {}]
  %s3 = inlined_call_operand.vmem [shape: f32[1,32], index: 3, kind: input, shape index: {}]
  %s4 = inlined_call_operand.vmem [shape: f32[1,32], index: 4, kind: input, shape index: {}]
  %s5 = inlined_call_operand.vmem [shape: f32[1,32], index: 5, kind: input, shape index: {}]
  %s6 = inlined_call_operand.vmem [shape: bf16[32,128], index: 6, kind: input, shape index: {}]
  %s7 = inlined_call_operand.vmem [shape: f32[1,128], index: 7, kind: input, shape index: {}]
  %s8 = inlined_call_operand.vmem [shape: bf16[128,32], index: 8, kind: input, shape index: {}]
  %s9 = inlined_call_operand.vmem [shape: f32[1,32], index: 9, kind: input, shape index: {}]
  %s10 = inlined_call_operand.vmem [shape: f32[16,32], index: 10, kind: output, shape index: {}]
  %s11 = sld [smem:[#allocation0]]
  $region58: #{transformer_layer.5} parent=0
    _
  %s13 = ssub.s32 1, %s11
  %s14 = scalar_select 0, %s13, %s11
  // Predicated region
  $region2: #{transformer_layer.5} parent=0 // pred_check
    _
  $region3: #{transformer_layer.5} parent=0 // pred_check_branch
    %16 = sbr.rel (0) target = $region5
  $region4: #{transformer_layer.5} parent=0 // pred_region
    _
  $region5: #{transformer_layer.5} parent=0 // pred_fallthru
    _
  // Predicated region
  $region6: #{transformer_layer.5} parent=0 // pred_check
    _
  $region7: #{transformer_layer.5} parent=0 // pred_check_branch
    %18 = sbr.rel (0) target = $region9
  $region8: #{transformer_layer.5} parent=0 // pred_region
    _
  $region9: #{transformer_layer.5} parent=0 // pred_fallthru
    _
  // Predicated region
  $region10: #{transformer_layer.5} parent=0 // pred_check
    _
  $region11: #{transformer_layer.5} parent=0 // pred_check_branch
    %20 = sbr.rel (0) target = $region13
  $region12: #{transformer_layer.5} parent=0 // pred_region
    _
  $region13: #{transformer_layer.5} parent=0 // pred_fallthru
    _
  // Predicated region
  $region14: #{transformer_layer.5} parent=0 // pred_check
    _
  $region15: #{transformer_layer.5} parent=0 // pred_check_branch
    %22 = sbr.rel (0) target = $region17
  $region16: #{transformer_layer.5} parent=0 // pred_region
    _
  $region17: #{transformer_layer.5} parent=0 // pred_fallthru
    _
  // Predicated region
  $region18: #{transformer_layer.5} parent=0 // pred_check
    _
  $region19: #{transformer_layer.5} parent=0 // pred_check_branch
    %24 = sbr.rel (0) target = $region21
  $region20: #{transformer_layer.5} parent=0 // pred_region
    _
  $region21: #{transformer_layer.5} parent=0 // pred_fallthru
    _
  // Predicated region
  $region22: #{transformer_layer.5} parent=0 // pred_check
    _
  $region23: #{transformer_layer.5} parent=0 // pred_check_branch
    %26 = sbr.rel (0) target = $region25
  $region24: #{transformer_layer.5} parent=0 // pred_region
    _
  $region25: #{transformer_layer.5} parent=0 // pred_fallthru
    _
  // Predicated region
  $region26: #{transformer_layer.5} parent=0 // pred_check
    _
  $region27: #{transformer_layer.5} parent=0 // pred_check_branch
    %28 = sbr.rel (0) target = $region29
  $region28: #{transformer_layer.5} parent=0 // pred_region
    _
  $region29: #{transformer_layer.5} parent=0 // pred_fallthru
    _
  // Predicated region
  $region30: #{transformer_layer.5} parent=0 // pred_check
    _
  $region31: #{transformer_layer.5} parent=0 // pred_check_branch
    %30 = sbr.rel (0) target = $region33
  $region32: #{transformer_layer.5} parent=0 // pred_region
    _
  $region33: #{transformer_layer.5} parent=0 // pred_fallthru
    _
  // Predicated region
  $region34: #{transformer_layer.5} parent=0 // pred_check
    _
  $region35: #{transformer_layer.5} parent=0 // pred_check_branch
    %32 = sbr.rel (0) target = $region37
  $region36: #{transformer_layer.5} parent=0 // pred_region
    _
  $region37: #{transformer_layer.5} parent=0 // pred_fallthru
    _
  // Predicated region
  $region38: #{transformer_layer.5} parent=0 // pred_check
    _
  $region39: #{transformer_layer.5} parent=0 // pred_check_branch
    %34 = sbr.rel (0) target = $region41
  $region40: #{transformer_layer.5} parent=0 // pred_region
    _
  $region41: #{transformer_layer.5} parent=0 // pred_fallthru
    _
  %p36 = scmp.eq.s32.totalorder 0, 0
  // Predicated region
  $region42: #{transformer_layer.5} parent=0 // pred_check
    %p37 = pneg %p36
  $region43: #{transformer_layer.5} parent=0 // pred_check_branch
    %39 = sbr.rel (%p37) target = $region45
  $region44: #{transformer_layer.5} parent=0 // pred_region
    %v40 = vld [vmem:[%s1] sm:$0xf]
    %v41 = vld [vmem:[%s1 + $0x4] sm:$0xf]
    %v42 = vld [vmem:[%s2] sm:$0xf]
    %v43 = vld [vmem:[%s2 + $0x4] sm:$0xf]
    %v44 = vld [vmem:[%s2 + $0x8] sm:$0xf]
    %v45 = vld [vmem:[%s2 + $0xc] sm:$0xf]
    %v46 = vld [vmem:[%s3] sm:$0x1]
    %v48 = vlaneseq
    %v49 = vshrl.u32 %v48, 7
    %v50 = vsub.s32 0, %v49
    %v51 = vrot.slane %v46, %v50
    %v55 = vunpack.c.l.b16 %v40
    %v56 = vunpack.c.l.b16 %v41
    %v57 = vpack.c.b16 %v56, %v55
    %v62 = vunpack.c.l.b16 %v42
    %v63 = vunpack.c.l.b16 %v43
    %v64 = vunpack.c.l.b16 %v44
    %v65 = vunpack.c.l.b16 %v45
    %v66 = vpack.c.b16 %v63, %v62
    %v67 = vpack.c.b16 %v65, %v64
    %vm70 = vcmask 261120
    %v72 = vsel %vm70, %v57, 0
    %74 = vmatprep.subr.bf16.mxu0 0
    %75 = vmatpush1.bf16.msra.mxu0 %v66
    %76 = vmatprep.subr.bf16.mxu0 0
    %77 = vmatpush1.bf16.msra.mxu0 %v67
    %78 = vmatprep.subr.bf16.mxu0 0
    %79 = vmatpush1.bf16.msra.mxu0 0
    %80 = vmatprep.subr.bf16.mxu0 0
    %81 = vmatpush1.bf16.msra.mxu0 0
    %82 = vmatprep.subr.bf16.mxu0 0
    %83 = vmatpush1.bf16.msra.mxu0 0
    %84 = vmatprep.subr.bf16.mxu0 0
    %85 = vmatpush1.bf16.msra.mxu0 0
    %86 = vmatprep.subr.bf16.mxu0 0
    %87 = vmatpush1.bf16.msra.mxu0 0
    %88 = vmatprep.subr.bf16.mxu0 0
    %89 = vmatpush1.bf16.msra.mxu0 0
    %90 = vmatprep.subr.bf16.mxu0 0
    %91 = vmatpush1.bf16.msra.mxu0 0
    %92 = vmatprep.subr.bf16.mxu0 0
    %93 = vmatpush1.bf16.msra.mxu0 0
    %94 = vmatprep.subr.bf16.mxu0 0
    %95 = vmatpush1.bf16.msra.mxu0 0
    %96 = vmatprep.subr.bf16.mxu0 0
    %97 = vmatpush1.bf16.msra.mxu0 0
    %98 = vmatprep.subr.bf16.mxu0 0
    %99 = vmatpush1.bf16.msra.mxu0 0
    %100 = vmatprep.subr.bf16.mxu0 0
    %101 = vmatpush1.bf16.msra.mxu0 0
    %102 = vmatprep.subr.bf16.mxu0 0
    %103 = vmatpush1.bf16.msra.mxu0 0
    %104 = vmatprep.subr.bf16.mxu0 0
    %105 = vmatpush1.bf16.msra.mxu0 0
    %106 = vmatprep.mubr.bf16.mxu0 0
    %107 = vmatmul.mubr.bf16.gmra.mrb[0].mxu0 %v72
    %v108 = vpop.f32.mrb[0].mxu0
    %v109 = vadd.f32 %v51, %v108
    %v110 = vpop.f32.mrb[0].mxu0
    %v111 = vpop.f32.mrb[0].mxu0
    %v112 = vadd.f32 %v51, %v111
    %v113 = vpop.f32.mrb[0].mxu0
    %114 = vdwg.mxu0
    %v115 = vld [vmem:[%s0] sm:$0xff]
    %v116 = vld [vmem:[%s0 + $0x8] sm:$0xff]
    %v117 = vadd.f32 %v115, %v109
    %v118 = vadd.f32 %v116, %v112
    %119 = vst.msk [vmem:[#allocation2] sm:$0xff] %vm70, %v117
    %120 = vst.msk [vmem:[#allocation2 + $0x8] sm:$0xff] %vm70, %v118
    %v121 = vld [vmem:[%s4] sm:$0x1]
    %v122 = vld [vmem:[%s5] sm:$0x1]
    %v123 = vsel %vm70, %v117, 0.0
    %124 = vadd.xlane.f32.xlu0 %v123
    %v125 = vpop.xlane.xlu0 %124
    %v126 = vsel %vm70, %v118, 0.0
    %127 = vadd.xlane.f32.xlu0 %v126
    %v128 = vpop.xlane.xlu0 %127
    %v129 = vrcp.pop 32.0
    %v130 = vmul.f32 %v125, %v129
    %v131 = vmul.f32 %v128, %v129
    %v132 = vsub.f32 %v117, %v130
    %v133 = vsub.f32 %v118, %v131
    %v134 = vmul.f32 %v132, %v132
    %v135 = vmul.f32 %v133, %v133
    %v136 = vsel %vm70, %v134, 0.0
    %137 = vadd.xlane.f32.xlu0 %v136
    %v138 = vpop.xlane.xlu0 %137
    %v139 = vsel %vm70, %v135, 0.0
    %140 = vadd.xlane.f32.xlu0 %v139
    %v141 = vpop.xlane.xlu0 %140
    %v142 = vmul.f32 %v138, %v129
    %v143 = vmul.f32 %v141, %v129
    %v144 = vadd.f32 %v142, 1e-05
    %v145 = vadd.f32 %v143, 1e-05
    %v146 = vrsqrt.pop %v144
    %v147 = vrsqrt.pop %v145
    %v148 = vmul.f32 %v132, %v146
    %v149 = vmul.f32 %v133, %v147
    %v151 = vlaneseq
    %v152 = vshrl.u32 %v151, 7
    %v153 = vsub.s32 0, %v152
    %v154 = vrot.slane %v121, %v153
    %v156 = vmul.f32 %v148, %v154
    %v157 = vmul.f32 %v149, %v154
    %v159 = vlaneseq
    %v160 = vshrl.u32 %v159, 7
    %v161 = vsub.s32 0, %v160
    %v162 = vrot.slane %v122, %v161
    %v164 = vadd.f32 %v156, %v162
    %v165 = vadd.f32 %v157, %v162
    %v166 = vpack.c.bf16 %v165, %v164
    %167 = vst.msk [vmem:[#allocation3] sm:$0xff] %vm70, %v166
    %168 = vst.msk [vmem:[#allocation4] sm:$0xff] %vm70, 0.0
    %169 = vst.msk [vmem:[#allocation4 + $0x8] sm:$0xff] %vm70, 0.0
  $region45: #{transformer_layer.5} parent=0 // pred_fallthru
    _
  %v170 = vld [vmem:[#allocation3] sm:$0xff]
  %v171 = vld [vmem:[%s6] sm:$0xf]
  %v172 = vld [vmem:[%s6 + $0x4] sm:$0xf]
  %v173 = vld [vmem:[%s6 + $0x8] sm:$0xf]
  %v174 = vld [vmem:[%s6 + $0xc] sm:$0xf]
  %v175 = vld [vmem:[%s7] sm:$0x1]
  %v177 = vlaneseq
  %v178 = vshrl.u32 %v177, 7
  %v179 = vsub.s32 0, %v178
  %v180 = vrot.slane %v175, %v179
  %v186 = vunpack.c.l.b16 %v171
  %v187 = vunpack.c.l.b16 %v172
  %v188 = vunpack.c.l.b16 %v173
  %v189 = vunpack.c.l.b16 %v174
  %v190 = vpack.c.b16 %v187, %v186
  %v191 = vpack.c.b16 %v189, %v188
  %vm194 = vcmask 261120
  %v196 = vsel %vm194, %v170, 0
  %198 = vmatprep.subr.bf16.mxu0 0
  %199 = vmatpush1.bf16.msra.mxu0 %v190
  %200 = vmatprep.subr.bf16.mxu0 0
  %201 = vmatpush1.bf16.msra.mxu0 %v191
  %202 = vmatprep.subr.bf16.mxu0 0
  %203 = vmatpush1.bf16.msra.mxu0 0
  %204 = vmatprep.subr.bf16.mxu0 0
  %205 = vmatpush1.bf16.msra.mxu0 0
  %206 = vmatprep.subr.bf16.mxu0 0
  %207 = vmatpush1.bf16.msra.mxu0 0
  %208 = vmatprep.subr.bf16.mxu0 0
  %209 = vmatpush1.bf16.msra.mxu0 0
  %210 = vmatprep.subr.bf16.mxu0 0
  %211 = vmatpush1.bf16.msra.mxu0 0
  %212 = vmatprep.subr.bf16.mxu0 0
  %213 = vmatpush1.bf16.msra.mxu0 0
  %214 = vmatprep.subr.bf16.mxu0 0
  %215 = vmatpush1.bf16.msra.mxu0 0
  %216 = vmatprep.subr.bf16.mxu0 0
  %217 = vmatpush1.bf16.msra.mxu0 0
  %218 = vmatprep.subr.bf16.mxu0 0
  %219 = vmatpush1.bf16.msra.mxu0 0
  %220 = vmatprep.subr.bf16.mxu0 0
  %221 = vmatpush1.bf16.msra.mxu0 0
  %222 = vmatprep.subr.bf16.mxu0 0
  %223 = vmatpush1.bf16.msra.mxu0 0
  %224 = vmatprep.subr.bf16.mxu0 0
  %225 = vmatpush1.bf16.msra.mxu0 0
  %226 = vmatprep.subr.bf16.mxu0 0
  %227 = vmatpush1.bf16.msra.mxu0 0
  %228 = vmatprep.subr.bf16.mxu0 0
  %229 = vmatpush1.bf16.msra.mxu0 0
  %230 = vmatprep.mubr.bf16.mxu0 0
  %231 = vmatmul.mubr.bf16.gmra.mrb[0].mxu0 %v196
  %v232 = vpop.f32.mrb[0].mxu0
  %v233 = vadd.f32 %v180, %v232
  %v234 = vpop.f32.mrb[0].mxu0
  %v235 = vpop.f32.mrb[0].mxu0
  %v236 = vadd.f32 %v180, %v235
  %v237 = vpop.f32.mrb[0].mxu0
  %238 = vdwg.mxu0
  %v239 = vmul.f32 %v233, 0.5
  %v240 = vmul.f32 %v236, 0.5
  %v241 = vmul.f32 %v233, 0.70710677
  %v242 = vmul.f32 %v236, 0.70710677
  %v243 = verf.f32.pop %v241
  %v244 = verf.f32.pop %v242
  %v245 = vadd.f32 %v243, 1.0
  %v246 = vadd.f32 %v244, 1.0
  %v247 = vmul.f32 %v239, %v245
  %v248 = vmul.f32 %v240, %v246
  %v249 = vld [vmem:[#allocation4] sm:$0xff]
  %v250 = vld [vmem:[#allocation4 + $0x8] sm:$0xff]
  %v251 = vpack.c.bf16 %v248, %v247
  %v252 = vld [vmem:[%s8] sm:$0xf]
  %v253 = vld [vmem:[%s8 + $0x4] sm:$0xf]
  %v254 = vld [vmem:[%s8 + $0x8] sm:$0xf]
  %v255 = vld [vmem:[%s8 + $0xc] sm:$0xf]
  %v256 = vld [vmem:[%s8 + $0x10] sm:$0xf]
  %v257 = vld [vmem:[%s8 + $0x14] sm:$0xf]
  %v258 = vld [vmem:[%s8 + $0x18] sm:$0xf]
  %v259 = vld [vmem:[%s8 + $0x1c] sm:$0xf]
  %v260 = vld [vmem:[%s8 + $0x20] sm:$0xf]
  %v261 = vld [vmem:[%s8 + $0x24] sm:$0xf]
  %v262 = vld [vmem:[%s8 + $0x28] sm:$0xf]
  %v263 = vld [vmem:[%s8 + $0x2c] sm:$0xf]
  %v264 = vld [vmem:[%s8 + $0x30] sm:$0xf]
  %v265 = vld [vmem:[%s8 + $0x34] sm:$0xf]
  %v266 = vld [vmem:[%s8 + $0x38] sm:$0xf]
  %v267 = vld [vmem:[%s8 + $0x3c] sm:$0xf]
  %v284 = vunpack.c.l.b16 %v252
  %v285 = vunpack.c.l.b16 %v253
  %v286 = vunpack.c.l.b16 %v254
  %v287 = vunpack.c.l.b16 %v255
  %v288 = vunpack.c.l.b16 %v256
  %v289 = vunpack.c.l.b16 %v257
  %v290 = vunpack.c.l.b16 %v258
  %v291 = vunpack.c.l.b16 %v259
  %v292 = vunpack.c.l.b16 %v260
  %v293 = vunpack.c.l.b16 %v261
  %v294 = vunpack.c.l.b16 %v262
  %v295 = vunpack.c.l.b16 %v263
  %v296 = vunpack.c.l.b16 %v264
  %v297 = vunpack.c.l.b16 %v265
  %v298 = vunpack.c.l.b16 %v266
  %v299 = vunpack.c.l.b16 %v267
  %v300 = vpack.c.b16 %v285, %v284
  %v301 = vpack.c.b16 %v287, %v286
  %v302 = vpack.c.b16 %v289, %v288
  %v303 = vpack.c.b16 %v291, %v290
  %v304 = vpack.c.b16 %v293, %v292
  %v305 = vpack.c.b16 %v295, %v294
  %v306 = vpack.c.b16 %v297, %v296
  %v307 = vpack.c.b16 %v299, %v298
  %316 = vmatprep.subr.bf16.mxu0 0
  %317 = vmatpush1.bf16.msra.mxu0 %v300
  %318 = vmatprep.subr.bf16.mxu0 0
  %319 = vmatpush1.bf16.msra.mxu0 %v301
  %320 = vmatprep.subr.bf16.mxu0 0
  %321 = vmatpush1.bf16.msra.mxu0 %v302
  %322 = vmatprep.subr.bf16.mxu0 0
  %323 = vmatpush1.bf16.msra.mxu0 %v303
  %324 = vmatprep.subr.bf16.mxu0 0
  %325 = vmatpush1.bf16.msra.mxu0 %v304
  %326 = vmatprep.subr.bf16.mxu0 0
  %327 = vmatpush1.bf16.msra.mxu0 %v305
  %328 = vmatprep.subr.bf16.mxu0 0
  %329 = vmatpush1.bf16.msra.mxu0 %v306
  %330 = vmatprep.subr.bf16.mxu0 0
  %331 = vmatpush1.bf16.msra.mxu0 %v307
  %332 = vmatprep.subr.bf16.mxu0 0
  %333 = vmatpush1.bf16.msra.mxu0 0
  %334 = vmatprep.subr.bf16.mxu0 0
  %335 = vmatpush1.bf16.msra.mxu0 0
  %336 = vmatprep.subr.bf16.mxu0 0
  %337 = vmatpush1.bf16.msra.mxu0 0
  %338 = vmatprep.subr.bf16.mxu0 0
  %339 = vmatpush1.bf16.msra.mxu0 0
  %340 = vmatprep.subr.bf16.mxu0 0
  %341 = vmatpush1.bf16.msra.mxu0 0
  %342 = vmatprep.subr.bf16.mxu0 0
  %343 = vmatpush1.bf16.msra.mxu0 0
  %344 = vmatprep.subr.bf16.mxu0 0
  %345 = vmatpush1.bf16.msra.mxu0 0
  %346 = vmatprep.subr.bf16.mxu0 0
  %347 = vmatpush1.bf16.msra.mxu0 0
  %348 = vmatprep.mubr.bf16.mxu0 0
  %349 = vmatmul.mubr.bf16.gmra.mrb[0].mxu0 %v251
  %v350 = vpop.f32.mrb[0].mxu0
  %v351 = vadd.f32 0.0, %v350
  %v352 = vpop.f32.mrb[0].mxu0
  %v353 = vpop.f32.mrb[0].mxu0
  %v354 = vadd.f32 0.0, %v353
  %v355 = vpop.f32.mrb[0].mxu0
  %356 = vdwg.mxu0
  %v357 = vadd.f32 %v249, %v351
  %v358 = vadd.f32 %v250, %v354
  %359 = vst.msk [vmem:[#allocation4] sm:$0xff] %vm194, %v357
  %360 = vst.msk [vmem:[#allocation4 + $0x8] sm:$0xff] %vm194, %v358
  // Predicated region
  $region46: #{transformer_layer.5} parent=0 // pred_check
    %p361 = pneg %p36
  $region47: #{transformer_layer.5} parent=0 // pred_check_branch
    %363 = sbr.rel (%p361) target = $region49
  $region48: #{transformer_layer.5} parent=0 // pred_region
    %v364 = vld [vmem:[#allocation2] sm:$0xff]
    %v365 = vld [vmem:[#allocation2 + $0x8] sm:$0xff]
    %v366 = vld [vmem:[#allocation4] sm:$0xff]
    %v367 = vld [vmem:[#allocation4 + $0x8] sm:$0xff]
    %v368 = vadd.f32 %v364, %v366
    %v369 = vadd.f32 %v365, %v367
    %v370 = vld [vmem:[%s9] sm:$0x1]
    %v372 = vlaneseq
    %v373 = vshrl.u32 %v372, 7
    %v374 = vsub.s32 0, %v373
    %v375 = vrot.slane %v370, %v374
    %v377 = vadd.f32 %v368, %v375
    %v378 = vadd.f32 %v369, %v375
    %379 = vst.msk [vmem:[%s10] sm:$0xff] %vm194, %v377
    %380 = vst.msk [vmem:[%s10 + $0x8] sm:$0xff] %vm194, %v378
  $region49: #{transformer_layer.5} parent=0 // pred_fallthru
    _
  // Predicated region
  $region50: #{transformer_layer.5} parent=0 // pred_check
    _
  $region51: #{transformer_layer.5} parent=0 // pred_check_branch
    %382 = sbr.rel (0) target = $region53
  $region52: #{transformer_layer.5} parent=0 // pred_region
    _
  $region53: #{transformer_layer.5} parent=0 // pred_fallthru
    _
  // Predicated region
  $region54: #{transformer_layer.5} parent=0 // pred_check
    _
  $region55: #{transformer_layer.5} parent=0 // pred_check_branch
    %384 = sbr.rel (0) target = $region57
  $region56: #{transformer_layer.5} parent=0 // pred_region
    _
  $region57: #{transformer_layer.5} parent=0 // pred_fallthru
    _

</llo_original>
